<compile_context>
chip_gen: v6e
topology: v6e:2x2x1
jax: 0.10.0
libtpu: 0.0.40
codegen_flags: <defaults>
</compile_context>

<pallas_src>
import math
from functools import partial

import jax
import jax.numpy as jnp
from jax import lax
from jax.experimental import pallas as pl
from jax.experimental.pallas import tpu as pltpu


# ----------------------------------------------------------------------------
# Fused kernel: QKV projections + multi-head attention + output projection.
# One (batch element, L tile) per grid step.
# ----------------------------------------------------------------------------
def _fused_attention_layer_kernel(*refs, n_heads, d_keys, d_values, scale,
                                  output_attention, shared_kv):
  it = iter(refs)
  q_in_ref = next(it)
  k_in_ref = next(it)
  v_in_ref = k_in_ref if shared_kv else next(it)
  wq_ref = next(it); bq_ref = next(it)
  wk_ref = next(it); bk_ref = next(it)
  wv_ref = next(it); bv_ref = next(it)
  wo_ref = next(it); bo_ref = next(it)
  out_ref = next(it)
  attn_ref = next(it) if output_attention else None

  f32 = jnp.float32
  bf16 = jnp.bfloat16
  tl = q_in_ref.shape[1]
  d_model = out_ref.shape[2]

  # Activations -> bf16 once (native MXU dtype on v5e/v6e/v7x); accumulate f32.
  x_q = q_in_ref[0].astype(bf16)                         # (tL, d_model)
  x_k = k_in_ref[0].astype(bf16)                         # (S,  d_model)
  x_v = x_k if shared_kv else v_in_ref[0].astype(bf16)   # (S,  d_model)

  # Fused, lane-dense Q/K/V projections; softmax scale folded into Q (cheaper
  # than scaling every (tL, S) score tile).
  q = (jnp.dot(x_q, wq_ref[...], preferred_element_type=f32)
       + bq_ref[...]) * scale                            # (tL, H*dk) f32
  k = jnp.dot(x_k, wk_ref[...], preferred_element_type=f32) + bk_ref[...]
  v = jnp.dot(x_v, wv_ref[...], preferred_element_type=f32) + bv_ref[...]
  q = q.astype(bf16)
  k = k.astype(bf16)
  v = v.astype(bf16)

  # Lane-dense f32 accumulator for the output projection (stores stay unmasked).
  y_acc = jnp.zeros((tl, d_model), f32)

  for h in range(n_heads):                               # static unroll
    qh = q[:, h * d_keys:(h + 1) * d_keys]               # (tL, dk) bf16
    kh = k[:, h * d_keys:(h + 1) * d_keys]               # (S,  dk) bf16
    vh = v[:, h * d_values:(h + 1) * d_values]           # (S,  dv) bf16

    # Contract the feature axis directly (no explicit K transpose).
    s = lax.dot_general(qh, kh, (((1,), (1,)), ((), ())),
                        preferred_element_type=f32)      # (tL, S) f32
    m = jnp.max(s, axis=-1, keepdims=True)
    e = jnp.exp(s - m)                                   # f32 softmax math
    denom = jnp.sum(e, axis=-1, keepdims=True)
    p = e * pl.reciprocal(denom, approx=False)           # exact: rows sum to 1

    if attn_ref is not None:
      attn_ref[0, h] = p.astype(attn_ref.dtype)          # bf16 HBM writeback

    ctx = jnp.dot(p.astype(bf16), vh,
                  preferred_element_type=f32)            # (tL, dv) f32
    # Output projection accumulated per head: sublane-aligned row slice of W_o.
    y_acc = y_acc + jnp.dot(ctx.astype(bf16),
                            wo_ref[h * d_values:(h + 1) * d_values, :],
                            preferred_element_type=f32)  # (tL, d_model) f32

  out_ref[0] = (y_acc + bo_ref[...]).astype(out_ref.dtype)


# ----------------------------------------------------------------------------
# Parameter init (deterministic, mimics nn.Linear uniform(-1/sqrt(in), 1/sqrt(in)))
# Weights stored (Din, Dout); biases stored (1, Dout).
# ----------------------------------------------------------------------------
def init_attention_layer(key, d_model, n_heads, d_keys=None, d_values=None,
                         dtype=jnp.float32):
  d_keys = d_keys or d_model // n_heads
  d_values = d_values or d_model // n_heads

  def lin_init(k, din, dout):
    kw, kb = jax.random.split(k)
    bound = 1.0 / math.sqrt(din)
    w = jax.random.uniform(kw, (din, dout), dtype, -bound, bound)
    b = jax.random.uniform(kb, (1, dout), dtype, -bound, bound)
    return w, b

  kq, kk, kv, ko = jax.random.split(key, 4)
  wq, bq = lin_init(kq, d_model, d_keys * n_heads)
  wk, bk = lin_init(kk, d_model, d_keys * n_heads)
  wv, bv = lin_init(kv, d_model, d_values * n_heads)
  wo, bo = lin_init(ko, d_values * n_heads, d_model)
  return dict(wq=wq, bq=bq, wk=wk, bk=bk, wv=wv, bv=bv, wo=wo, bo=bo,
              n_heads=n_heads, d_keys=d_keys, d_values=d_values)


def _l_tile(L, max_tile=256):
  """Largest L tile <= max_tile that divides L and is a multiple of 8."""
  if L <= max_tile:
    return L
  for t in (256, 128, 64, 32, 16, 8):
    if t <= max_tile and L % t == 0:
      return t
  return L  # fall back to the full (untile-able) extent


def _vmem_limit_bytes(tl, S, d_model, H, dk, dv, act_itemsize, out_itemsize,
                      n_act_inputs, output_attention):
  """Rough scoped-VMEM budget: double-buffered blocks + in-kernel temporaries."""
  act = 2 * (tl + (n_act_inputs - 1) * S) * d_model * act_itemsize
  wgt = 2 * (3 * d_model * H * dk + H * dv * d_model) * 2      # bf16 weights x2 buffers
  bias = 2 * (3 * H * dk + d_model) * 4
  outb = 2 * tl * d_model * out_itemsize
  attnb = 2 * H * tl * S * 2 if output_attention else 0        # bf16 attn block
  # q/k/v f32 + bf16 copies, a few (tL,S) f32 score temporaries, f32 accumulator.
  tmp = ((tl + 2 * S) * H * max(dk, dv) * 6
         + 4 * tl * S * 4 + tl * d_model * 4)
  est = int(1.25 * (act + wgt + bias + outb + attnb + tmp))
  return int(min(128 * 1024 * 1024, max(est, 32 * 1024 * 1024)))


# ----------------------------------------------------------------------------
# AttentionLayer.forward
# ----------------------------------------------------------------------------
def attention_layer_forward(params, queries, keys, values, attn_mask=None,
                            tau=None, delta=None, output_attention=False):
  # TODO(synk): attn_mask is ignored (FullAttention mask_flag=False semantics).
  del attn_mask, tau, delta

  B, L, d_model = queries.shape
  _, S, _ = keys.shape
  H = params["n_heads"]
  dk = params["d_keys"]
  dv = params["d_values"]
  scale = 1.0 / math.sqrt(dk)

  shared_kv = keys is values          # dedup K/V activation DMA when identical
  tl = _l_tile(L)
  n_lt = L // tl

  bf16 = jnp.bfloat16
  # Weights in bf16 (native MXU dtype, half the DMA bytes); biases stay f32.
  wq = params["wq"].astype(bf16); bq = params["bq"]
  wk = params["wk"].astype(bf16); bk = params["bk"]
  wv = params["wv"].astype(bf16); bv = params["bv"]
  wo = params["wo"].astype(bf16); bo = params["bo"]

  def const_spec(arr):
    # Constant block index -> stays VMEM-resident across the whole grid.
    # (pl.Buffered(1) would additionally drop the second buffer; left at the
    #  default to keep this portable.)
    return pl.BlockSpec(arr.shape, lambda b, lt: (0, 0))

  q_spec = pl.BlockSpec((1, tl, d_model), lambda b, lt: (b, lt, 0))
  kv_spec = pl.BlockSpec((1, S, d_model), lambda b, lt: (b, 0, 0))

  in_specs = [q_spec, kv_spec] + ([] if shared_kv else [kv_spec])
  inputs = [queries, keys] + ([] if shared_kv else [values])
  for w in (wq, bq, wk, bk, wv, bv, wo, bo):
    in_specs.append(const_spec(w))
    inputs.append(w)

  out_struct = jax.ShapeDtypeStruct((B, L, d_model), queries.dtype)
  out_spec = pl.BlockSpec((1, tl, d_model), lambda b, lt: (b, lt, 0))
  if output_attention:
    # bf16 writeback: halves the dominant HBM store + its double-buffered VMEM.
    out_shape = (out_struct, jax.ShapeDtypeStruct((B, H, L, S), jnp.bfloat16))
    out_specs = (out_spec,
                 pl.BlockSpec((1, H, tl, S), lambda b, lt: (b, 0, lt, 0)))
  else:
    out_shape = out_struct
    out_specs = out_spec

  kernel = partial(_fused_attention_layer_kernel, n_heads=H, d_keys=dk,
                   d_values=dv, scale=scale, output_attention=output_attention,
                   shared_kv=shared_kv)

  vmem_limit = _vmem_limit_bytes(
      tl, S, d_model, H, dk, dv,
      act_itemsize=queries.dtype.itemsize,
      out_itemsize=jnp.dtype(queries.dtype).itemsize,
      n_act_inputs=2 if shared_kv else 3,
      output_attention=output_attention)

  result = pl.pallas_call(
      kernel,
      out_shape=out_shape,
      grid=(B, n_lt),
      in_specs=in_specs,
      out_specs=out_specs,
      compiler_params=pltpu.CompilerParams(
          # Both axes independent -> megacore shards them on v7x.
          dimension_semantics=("parallel", "parallel"),
          vmem_limit_bytes=vmem_limit),
  )(*inputs)

  if output_attention:
    out, attn = result
    return out, attn
  return result, None


# ----------------------------------------------------------------------------
# Pure-JAX (f32) reference for a silent correctness check
# ----------------------------------------------------------------------------
def _reference(params, queries, keys, values):
  B, L, d_model = queries.shape
  S = keys.shape[1]
  H, dk, dv = params["n_heads"], params["d_keys"], params["d_values"]
  q = (queries @ params["wq"] + params["bq"]).reshape(B, L, H, dk)
  k = (keys @ params["wk"] + params["bk"]).reshape(B, S, H, dk)
  v = (values @ params["wv"] + params["bv"]).reshape(B, S, H, dv)
  scale = 1.0 / math.sqrt(dk)
  scores = jnp.einsum("blhe,bshe->bhls", q, k) * scale
  attn = jax.nn.softmax(scores, axis=-1)
  o = jnp.einsum("bhls,bshd->blhd", attn, v).reshape(B, L, H * dv)
  return o @ params["wo"] + params["bo"], attn


if __name__ == "__main__":
  B, L, S = 2, 8, 8
  d_model, n_heads = 32, 4

  key = jax.random.PRNGKey(0)
  kp, kq, kk, kv = jax.random.split(key, 4)
  params = init_attention_layer(kp, d_model, n_heads)

  queries = jax.random.normal(kq, (B, L, d_model), jnp.float32)
  keys_in = jax.random.normal(kk, (B, S, d_model), jnp.float32)
  values = jax.random.normal(kv, (B, S, d_model), jnp.float32)

  # Full path (returns the attention matrix, like FullAttention(output_attention=True)).
  out, attn = attention_layer_forward(params, queries, keys_in, values,
                                      output_attention=True)
  jax.block_until_ready((out, attn))

  # Default fast path: no (B,H,L,S) HBM writeback.
  out_fast, _ = attention_layer_forward(params, queries, keys_in, values,
                                        output_attention=False)
  jax.block_until_ready(out_fast)

  # Shared-KV path (keys is values): K/V activation slab DMA'd once.
  out_kv, _ = attention_layer_forward(params, queries, keys_in, keys_in,
                                      output_attention=False)
  jax.block_until_ready(out_kv)

  ref_out, ref_attn = _reference(params, queries, keys_in, values)
  ref_out_kv, _ = _reference(params, queries, keys_in, keys_in)

  # Tolerances sized for bf16 MXU inputs (f32 accumulation, f32 softmax).
  tol = dict(atol=2e-2, rtol=2e-2)
  assert jnp.allclose(out, ref_out, **tol)
  assert jnp.allclose(attn.astype(jnp.float32), ref_attn, **tol)
  assert jnp.allclose(out_fast, ref_out, **tol)
  assert jnp.allclose(out_kv, ref_out_kv, **tol)

  print("KERNEL_OK")
</pallas_src>

<mosaic_0001>
module attributes {stable_mosaic.version = 11 : i64} {
  func.func @_fused_attention_layer_kernel(%arg0: i32, %arg1: i32, %arg2: memref<1x8x32xf32, #tpu.memory_space<vmem>>, %arg3: memref<1x8x32xf32, #tpu.memory_space<vmem>>, %arg4: memref<1x8x32xf32, #tpu.memory_space<vmem>>, %arg5: memref<32x32xbf16, #tpu.memory_space<vmem>>, %arg6: memref<1x32xf32, #tpu.memory_space<vmem>>, %arg7: memref<32x32xbf16, #tpu.memory_space<vmem>>, %arg8: memref<1x32xf32, #tpu.memory_space<vmem>>, %arg9: memref<32x32xbf16, #tpu.memory_space<vmem>>, %arg10: memref<1x32xf32, #tpu.memory_space<vmem>>, %arg11: memref<32x32xbf16, #tpu.memory_space<vmem>>, %arg12: memref<1x32xf32, #tpu.memory_space<vmem>>, %arg13: memref<1x8x32xf32, #tpu.memory_space<vmem>>, %arg14: memref<1x4x8x8xbf16, #tpu.memory_space<vmem>>) attributes {dimension_semantics = [#tpu.dimension_semantics<parallel>, #tpu.dimension_semantics<parallel>], iteration_bounds = array<i64: 2, 1>, scalar_prefetch = 0 : i64, scratch_operands = 0 : i64, tpu.core_type = #tpu.core_type<tc>, window_params = [{transform_indices = @transform_0, window_bounds = array<i64: 1, 8, 32>}, {transform_indices = @transform_1, window_bounds = array<i64: 1, 8, 32>}, {transform_indices = @transform_2, window_bounds = array<i64: 1, 8, 32>}, {pipeline_mode = #tpu.pipeline_mode<synchronous>, transform_indices = @transform_3, window_bounds = array<i64: 32, 32>}, {pipeline_mode = #tpu.pipeline_mode<synchronous>, transform_indices = @transform_4, window_bounds = array<i64: 1, 32>}, {pipeline_mode = #tpu.pipeline_mode<synchronous>, transform_indices = @transform_5, window_bounds = array<i64: 32, 32>}, {pipeline_mode = #tpu.pipeline_mode<synchronous>, transform_indices = @transform_6, window_bounds = array<i64: 1, 32>}, {pipeline_mode = #tpu.pipeline_mode<synchronous>, transform_indices = @transform_7, window_bounds = array<i64: 32, 32>}, {pipeline_mode = #tpu.pipeline_mode<synchronous>, transform_indices = @transform_8, window_bounds = array<i64: 1, 32>}, {pipeline_mode = #tpu.pipeline_mode<synchronous>, transform_indices = @transform_9, window_bounds = array<i64: 32, 32>}, {pipeline_mode = #tpu.pipeline_mode<synchronous>, transform_indices = @transform_10, window_bounds = array<i64: 1, 32>}, {transform_indices = @transform_11, window_bounds = array<i64: 1, 8, 32>}, {transform_indices = @transform_12, window_bounds = array<i64: 1, 4, 8, 8>}]} {
    %c0 = arith.constant 0 : index
    %c0_0 = arith.constant 0 : index
    %c0_1 = arith.constant 0 : index
    %0 = vector.load %arg2[%c0, %c0_0, %c0_1] : memref<1x8x32xf32, #tpu.memory_space<vmem>>, vector<1x8x32xf32>
    %1 = vector.shape_cast %0 : vector<1x8x32xf32> to vector<8x32xf32>
    %2 = arith.truncf %1 : vector<8x32xf32> to vector<8x32xbf16>
    %c0_2 = arith.constant 0 : index
    %c0_3 = arith.constant 0 : index
    %c0_4 = arith.constant 0 : index
    %3 = vector.load %arg3[%c0_2, %c0_3, %c0_4] : memref<1x8x32xf32, #tpu.memory_space<vmem>>, vector<1x8x32xf32>
    %4 = vector.shape_cast %3 : vector<1x8x32xf32> to vector<8x32xf32>
    %5 = arith.truncf %4 : vector<8x32xf32> to vector<8x32xbf16>
    %c0_5 = arith.constant 0 : index
    %c0_6 = arith.constant 0 : index
    %c0_7 = arith.constant 0 : index
    %6 = vector.load %arg4[%c0_5, %c0_6, %c0_7] : memref<1x8x32xf32, #tpu.memory_space<vmem>>, vector<1x8x32xf32>
    %7 = vector.shape_cast %6 : vector<1x8x32xf32> to vector<8x32xf32>
    %8 = arith.truncf %7 : vector<8x32xf32> to vector<8x32xbf16>
    %c0_8 = arith.constant 0 : index
    %c0_9 = arith.constant 0 : index
    %9 = vector.load %arg5[%c0_8, %c0_9] : memref<32x32xbf16, #tpu.memory_space<vmem>>, vector<32x32xbf16>
    %cst = arith.constant dense<0.000000e+00> : vector<8x32xf32>
    %10 = tpu.matmul %2, %9, %cst {dimension_numbers = #tpu.dot_dimension_numbers<[1], [0], [0], [1], [0, 0, 1, 1], [], []>} : vector<8x32xbf16>, vector<32x32xbf16>, vector<8x32xf32> -> vector<8x32xf32>
    %c0_10 = arith.constant 0 : index
    %c0_11 = arith.constant 0 : index
    %11 = vector.load %arg6[%c0_10, %c0_11] : memref<1x32xf32, #tpu.memory_space<vmem>>, vector<1x32xf32>
    %12 = vector.broadcast %11 : vector<1x32xf32> to vector<8x32xf32>
    %13 = arith.addf %10, %12 : vector<8x32xf32>
    %cst_12 = arith.constant 0.353553385 : f32
    %14 = vector.broadcast %cst_12 : f32 to vector<8x32xf32>
    %15 = arith.mulf %13, %14 : vector<8x32xf32>
    %c0_13 = arith.constant 0 : index
    %c0_14 = arith.constant 0 : index
    %16 = vector.load %arg7[%c0_13, %c0_14] : memref<32x32xbf16, #tpu.memory_space<vmem>>, vector<32x32xbf16>
    %cst_15 = arith.constant dense<0.000000e+00> : vector<8x32xf32>
    %17 = tpu.matmul %5, %16, %cst_15 {dimension_numbers = #tpu.dot_dimension_numbers<[1], [0], [0], [1], [0, 0, 1, 1], [], []>} : vector<8x32xbf16>, vector<32x32xbf16>, vector<8x32xf32> -> vector<8x32xf32>
    %c0_16 = arith.constant 0 : index
    %c0_17 = arith.constant 0 : index
    %18 = vector.load %arg8[%c0_16, %c0_17] : memref<1x32xf32, #tpu.memory_space<vmem>>, vector<1x32xf32>
    %19 = vector.broadcast %18 : vector<1x32xf32> to vector<8x32xf32>
    %20 = arith.addf %17, %19 : vector<8x32xf32>
    %c0_18 = arith.constant 0 : index
    %c0_19 = arith.constant 0 : index
    %21 = vector.load %arg9[%c0_18, %c0_19] : memref<32x32xbf16, #tpu.memory_space<vmem>>, vector<32x32xbf16>
    %cst_20 = arith.constant dense<0.000000e+00> : vector<8x32xf32>
    %22 = tpu.matmul %8, %21, %cst_20 {dimension_numbers = #tpu.dot_dimension_numbers<[1], [0], [0], [1], [0, 0, 1, 1], [], []>} : vector<8x32xbf16>, vector<32x32xbf16>, vector<8x32xf32> -> vector<8x32xf32>
    %c0_21 = arith.constant 0 : index
    %c0_22 = arith.constant 0 : index
    %23 = vector.load %arg10[%c0_21, %c0_22] : memref<1x32xf32, #tpu.memory_space<vmem>>, vector<1x32xf32>
    %24 = vector.broadcast %23 : vector<1x32xf32> to vector<8x32xf32>
    %25 = arith.addf %22, %24 : vector<8x32xf32>
    %26 = arith.truncf %15 : vector<8x32xf32> to vector<8x32xbf16>
    %27 = arith.truncf %20 : vector<8x32xf32> to vector<8x32xbf16>
    %28 = arith.truncf %25 : vector<8x32xf32> to vector<8x32xbf16>
    %cst_23 = arith.constant 0.000000e+00 : f32
    %29 = vector.broadcast %cst_23 : f32 to vector<8x32xf32>
    %30 = vector.extract_strided_slice %26 {offsets = [0, 0], sizes = [8, 8], strides = [1, 1]} : vector<8x32xbf16> to vector<8x8xbf16>
    %31 = vector.extract_strided_slice %27 {offsets = [0, 0], sizes = [8, 8], strides = [1, 1]} : vector<8x32xbf16> to vector<8x8xbf16>
    %32 = vector.extract_strided_slice %28 {offsets = [0, 0], sizes = [8, 8], strides = [1, 1]} : vector<8x32xbf16> to vector<8x8xbf16>
    %cst_24 = arith.constant dense<0.000000e+00> : vector<8x8xf32>
    %33 = tpu.matmul %30, %31, %cst_24 {dimension_numbers = #tpu.dot_dimension_numbers<[1], [1], [0], [0], [0, 0, 1, 0], [], []>} : vector<8x8xbf16>, vector<8x8xbf16>, vector<8x8xf32> -> vector<8x8xf32>
    %cst_25 = arith.constant dense<0xFF800000> : vector<8xf32>
    %34 = vector.multi_reduction <maximumf>, %33, %cst_25 [1] : vector<8x8xf32> to vector<8xf32>
    %35 = vector.shape_cast %34 : vector<8xf32> to vector<8x1xf32>
    %36 = vector.broadcast %35 : vector<8x1xf32> to vector<8x8xf32>
    %37 = arith.subf %33, %36 : vector<8x8xf32>
    %38 = math.exp %37 : vector<8x8xf32>
    %cst_26 = arith.constant dense<0.000000e+00> : vector<8xf32>
    %39 = vector.multi_reduction <add>, %38, %cst_26 [1] : vector<8x8xf32> to vector<8xf32>
    %40 = vector.shape_cast %39 : vector<8xf32> to vector<8x1xf32>
    %41 = tpu.reciprocal %40 : vector<8x1xf32> -> vector<8x1xf32>
    %42 = vector.broadcast %41 : vector<8x1xf32> to vector<8x8xf32>
    %43 = arith.mulf %38, %42 : vector<8x8xf32>
    %44 = arith.truncf %43 : vector<8x8xf32> to vector<8x8xbf16>
    %c0_27 = arith.constant 0 : index
    %c0_28 = arith.constant 0 : index
    %c0_29 = arith.constant 0 : index
    %c0_30 = arith.constant 0 : index
    %45 = vector.load %arg14[%c0_27, %c0_28, %c0_29, %c0_30] : memref<1x4x8x8xbf16, #tpu.memory_space<vmem>>, vector<1x1x8x8xbf16>
    %46 = vector.shape_cast %45 : vector<1x1x8x8xbf16> to vector<8x8xbf16>
    %47 = vector.shape_cast %44 : vector<8x8xbf16> to vector<1x1x8x8xbf16>
    tpu.vector_store %arg14[%c0_27, %c0_28, %c0_29, %c0_30], %47 {strides = array<i32>} : memref<1x4x8x8xbf16, #tpu.memory_space<vmem>>, vector<1x1x8x8xbf16>,
    %48 = arith.truncf %43 : vector<8x8xf32> to vector<8x8xbf16>
    %cst_31 = arith.constant dense<0.000000e+00> : vector<8x8xf32>
    %49 = tpu.matmul %48, %32, %cst_31 {dimension_numbers = #tpu.dot_dimension_numbers<[1], [0], [0], [1], [0, 0, 1, 1], [], []>} : vector<8x8xbf16>, vector<8x8xbf16>, vector<8x8xf32> -> vector<8x8xf32>
    %50 = arith.truncf %49 : vector<8x8xf32> to vector<8x8xbf16>
    %c0_32 = arith.constant 0 : index
    %c0_33 = arith.constant 0 : index
    %51 = vector.load %arg11[%c0_32, %c0_33] : memref<32x32xbf16, #tpu.memory_space<vmem>>, vector<8x32xbf16>
    %cst_34 = arith.constant dense<0.000000e+00> : vector<8x32xf32>
    %52 = tpu.matmul %50, %51, %cst_34 {dimension_numbers = #tpu.dot_dimension_numbers<[1], [0], [0], [1], [0, 0, 1, 1], [], []>} : vector<8x8xbf16>, vector<8x32xbf16>, vector<8x32xf32> -> vector<8x32xf32>
    %53 = arith.addf %29, %52 : vector<8x32xf32>
    %54 = vector.extract_strided_slice %26 {offsets = [0, 8], sizes = [8, 8], strides = [1, 1]} : vector<8x32xbf16> to vector<8x8xbf16>
    %55 = vector.extract_strided_slice %27 {offsets = [0, 8], sizes = [8, 8], strides = [1, 1]} : vector<8x32xbf16> to vector<8x8xbf16>
    %56 = vector.extract_strided_slice %28 {offsets = [0, 8], sizes = [8, 8], strides = [1, 1]} : vector<8x32xbf16> to vector<8x8xbf16>
    %cst_35 = arith.constant dense<0.000000e+00> : vector<8x8xf32>
    %57 = tpu.matmul %54, %55, %cst_35 {dimension_numbers = #tpu.dot_dimension_numbers<[1], [1], [0], [0], [0, 0, 1, 0], [], []>} : vector<8x8xbf16>, vector<8x8xbf16>, vector<8x8xf32> -> vector<8x8xf32>
    %cst_36 = arith.constant dense<0xFF800000> : vector<8xf32>
    %58 = vector.multi_reduction <maximumf>, %57, %cst_36 [1] : vector<8x8xf32> to vector<8xf32>
    %59 = vector.shape_cast %58 : vector<8xf32> to vector<8x1xf32>
    %60 = vector.broadcast %59 : vector<8x1xf32> to vector<8x8xf32>
    %61 = arith.subf %57, %60 : vector<8x8xf32>
    %62 = math.exp %61 : vector<8x8xf32>
    %cst_37 = arith.constant dense<0.000000e+00> : vector<8xf32>
    %63 = vector.multi_reduction <add>, %62, %cst_37 [1] : vector<8x8xf32> to vector<8xf32>
    %64 = vector.shape_cast %63 : vector<8xf32> to vector<8x1xf32>
    %65 = tpu.reciprocal %64 : vector<8x1xf32> -> vector<8x1xf32>
    %66 = vector.broadcast %65 : vector<8x1xf32> to vector<8x8xf32>
    %67 = arith.mulf %62, %66 : vector<8x8xf32>
    %68 = arith.truncf %67 : vector<8x8xf32> to vector<8x8xbf16>
    %c0_38 = arith.constant 0 : index
    %c1 = arith.constant 1 : index
    %c0_39 = arith.constant 0 : index
    %c0_40 = arith.constant 0 : index
    %69 = vector.load %arg14[%c0_38, %c1, %c0_39, %c0_40] : memref<1x4x8x8xbf16, #tpu.memory_space<vmem>>, vector<1x1x8x8xbf16>
    %70 = vector.shape_cast %69 : vector<1x1x8x8xbf16> to vector<8x8xbf16>
    %71 = vector.shape_cast %68 : vector<8x8xbf16> to vector<1x1x8x8xbf16>
    tpu.vector_store %arg14[%c0_38, %c1, %c0_39, %c0_40], %71 {strides = array<i32>} : memref<1x4x8x8xbf16, #tpu.memory_space<vmem>>, vector<1x1x8x8xbf16>,
    %72 = arith.truncf %67 : vector<8x8xf32> to vector<8x8xbf16>
    %cst_41 = arith.constant dense<0.000000e+00> : vector<8x8xf32>
    %73 = tpu.matmul %72, %56, %cst_41 {dimension_numbers = #tpu.dot_dimension_numbers<[1], [0], [0], [1], [0, 0, 1, 1], [], []>} : vector<8x8xbf16>, vector<8x8xbf16>, vector<8x8xf32> -> vector<8x8xf32>
    %74 = arith.truncf %73 : vector<8x8xf32> to vector<8x8xbf16>
    %c8 = arith.constant 8 : index
    %c0_42 = arith.constant 0 : index
    %75 = vector.load %arg11[%c8, %c0_42] : memref<32x32xbf16, #tpu.memory_space<vmem>>, vector<8x32xbf16>
    %cst_43 = arith.constant dense<0.000000e+00> : vector<8x32xf32>
    %76 = tpu.matmul %74, %75, %cst_43 {dimension_numbers = #tpu.dot_dimension_numbers<[1], [0], [0], [1], [0, 0, 1, 1], [], []>} : vector<8x8xbf16>, vector<8x32xbf16>, vector<8x32xf32> -> vector<8x32xf32>
    %77 = arith.addf %53, %76 : vector<8x32xf32>
    %78 = vector.extract_strided_slice %26 {offsets = [0, 16], sizes = [8, 8], strides = [1, 1]} : vector<8x32xbf16> to vector<8x8xbf16>
    %79 = vector.extract_strided_slice %27 {offsets = [0, 16], sizes = [8, 8], strides = [1, 1]} : vector<8x32xbf16> to vector<8x8xbf16>
    %80 = vector.extract_strided_slice %28 {offsets = [0, 16], sizes = [8, 8], strides = [1, 1]} : vector<8x32xbf16> to vector<8x8xbf16>
    %cst_44 = arith.constant dense<0.000000e+00> : vector<8x8xf32>
    %81 = tpu.matmul %78, %79, %cst_44 {dimension_numbers = #tpu.dot_dimension_numbers<[1], [1], [0], [0], [0, 0, 1, 0], [], []>} : vector<8x8xbf16>, vector<8x8xbf16>, vector<8x8xf32> -> vector<8x8xf32>
    %cst_45 = arith.constant dense<0xFF800000> : vector<8xf32>
    %82 = vector.multi_reduction <maximumf>, %81, %cst_45 [1] : vector<8x8xf32> to vector<8xf32>
    %83 = vector.shape_cast %82 : vector<8xf32> to vector<8x1xf32>
    %84 = vector.broadcast %83 : vector<8x1xf32> to vector<8x8xf32>
    %85 = arith.subf %81, %84 : vector<8x8xf32>
    %86 = math.exp %85 : vector<8x8xf32>
    %cst_46 = arith.constant dense<0.000000e+00> : vector<8xf32>
    %87 = vector.multi_reduction <add>, %86, %cst_46 [1] : vector<8x8xf32> to vector<8xf32>
    %88 = vector.shape_cast %87 : vector<8xf32> to vector<8x1xf32>
    %89 = tpu.reciprocal %88 : vector<8x1xf32> -> vector<8x1xf32>
    %90 = vector.broadcast %89 : vector<8x1xf32> to vector<8x8xf32>
    %91 = arith.mulf %86, %90 : vector<8x8xf32>
    %92 = arith.truncf %91 : vector<8x8xf32> to vector<8x8xbf16>
    %c0_47 = arith.constant 0 : index
    %c2 = arith.constant 2 : index
    %c0_48 = arith.constant 0 : index
    %c0_49 = arith.constant 0 : index
    %93 = vector.load %arg14[%c0_47, %c2, %c0_48, %c0_49] : memref<1x4x8x8xbf16, #tpu.memory_space<vmem>>, vector<1x1x8x8xbf16>
    %94 = vector.shape_cast %93 : vector<1x1x8x8xbf16> to vector<8x8xbf16>
    %95 = vector.shape_cast %92 : vector<8x8xbf16> to vector<1x1x8x8xbf16>
    tpu.vector_store %arg14[%c0_47, %c2, %c0_48, %c0_49], %95 {strides = array<i32>} : memref<1x4x8x8xbf16, #tpu.memory_space<vmem>>, vector<1x1x8x8xbf16>,
    %96 = arith.truncf %91 : vector<8x8xf32> to vector<8x8xbf16>
    %cst_50 = arith.constant dense<0.000000e+00> : vector<8x8xf32>
    %97 = tpu.matmul %96, %80, %cst_50 {dimension_numbers = #tpu.dot_dimension_numbers<[1], [0], [0], [1], [0, 0, 1, 1], [], []>} : vector<8x8xbf16>, vector<8x8xbf16>, vector<8x8xf32> -> vector<8x8xf32>
    %98 = arith.truncf %97 : vector<8x8xf32> to vector<8x8xbf16>
    %c16 = arith.constant 16 : index
    %c0_51 = arith.constant 0 : index
    %99 = vector.load %arg11[%c16, %c0_51] : memref<32x32xbf16, #tpu.memory_space<vmem>>, vector<8x32xbf16>
    %cst_52 = arith.constant dense<0.000000e+00> : vector<8x32xf32>
    %100 = tpu.matmul %98, %99, %cst_52 {dimension_numbers = #tpu.dot_dimension_numbers<[1], [0], [0], [1], [0, 0, 1, 1], [], []>} : vector<8x8xbf16>, vector<8x32xbf16>, vector<8x32xf32> -> vector<8x32xf32>
    %101 = arith.addf %77, %100 : vector<8x32xf32>
    %102 = vector.extract_strided_slice %26 {offsets = [0, 24], sizes = [8, 8], strides = [1, 1]} : vector<8x32xbf16> to vector<8x8xbf16>
    %103 = vector.extract_strided_slice %27 {offsets = [0, 24], sizes = [8, 8], strides = [1, 1]} : vector<8x32xbf16> to vector<8x8xbf16>
    %104 = vector.extract_strided_slice %28 {offsets = [0, 24], sizes = [8, 8], strides = [1, 1]} : vector<8x32xbf16> to vector<8x8xbf16>
    %cst_53 = arith.constant dense<0.000000e+00> : vector<8x8xf32>
    %105 = tpu.matmul %102, %103, %cst_53 {dimension_numbers = #tpu.dot_dimension_numbers<[1], [1], [0], [0], [0, 0, 1, 0], [], []>} : vector<8x8xbf16>, vector<8x8xbf16>, vector<8x8xf32> -> vector<8x8xf32>
    %cst_54 = arith.constant dense<0xFF800000> : vector<8xf32>
    %106 = vector.multi_reduction <maximumf>, %105, %cst_54 [1] : vector<8x8xf32> to vector<8xf32>
    %107 = vector.shape_cast %106 : vector<8xf32> to vector<8x1xf32>
    %108 = vector.broadcast %107 : vector<8x1xf32> to vector<8x8xf32>
    %109 = arith.subf %105, %108 : vector<8x8xf32>
    %110 = math.exp %109 : vector<8x8xf32>
    %cst_55 = arith.constant dense<0.000000e+00> : vector<8xf32>
    %111 = vector.multi_reduction <add>, %110, %cst_55 [1] : vector<8x8xf32> to vector<8xf32>
    %112 = vector.shape_cast %111 : vector<8xf32> to vector<8x1xf32>
    %113 = tpu.reciprocal %112 : vector<8x1xf32> -> vector<8x1xf32>
    %114 = vector.broadcast %113 : vector<8x1xf32> to vector<8x8xf32>
    %115 = arith.mulf %110, %114 : vector<8x8xf32>
    %116 = arith.truncf %115 : vector<8x8xf32> to vector<8x8xbf16>
    %c0_56 = arith.constant 0 : index
    %c3 = arith.constant 3 : index
    %c0_57 = arith.constant 0 : index
    %c0_58 = arith.constant 0 : index
    %117 = vector.load %arg14[%c0_56, %c3, %c0_57, %c0_58] : memref<1x4x8x8xbf16, #tpu.memory_space<vmem>>, vector<1x1x8x8xbf16>
    %118 = vector.shape_cast %117 : vector<1x1x8x8xbf16> to vector<8x8xbf16>
    %119 = vector.shape_cast %116 : vector<8x8xbf16> to vector<1x1x8x8xbf16>
    tpu.vector_store %arg14[%c0_56, %c3, %c0_57, %c0_58], %119 {strides = array<i32>} : memref<1x4x8x8xbf16, #tpu.memory_space<vmem>>, vector<1x1x8x8xbf16>,
    %120 = arith.truncf %115 : vector<8x8xf32> to vector<8x8xbf16>
    %cst_59 = arith.constant dense<0.000000e+00> : vector<8x8xf32>
    %121 = tpu.matmul %120, %104, %cst_59 {dimension_numbers = #tpu.dot_dimension_numbers<[1], [0], [0], [1], [0, 0, 1, 1], [], []>} : vector<8x8xbf16>, vector<8x8xbf16>, vector<8x8xf32> -> vector<8x8xf32>
    %122 = arith.truncf %121 : vector<8x8xf32> to vector<8x8xbf16>
    %c24 = arith.constant 24 : index
    %c0_60 = arith.constant 0 : index
    %123 = vector.load %arg11[%c24, %c0_60] : memref<32x32xbf16, #tpu.memory_space<vmem>>, vector<8x32xbf16>
    %cst_61 = arith.constant dense<0.000000e+00> : vector<8x32xf32>
    %124 = tpu.matmul %122, %123, %cst_61 {dimension_numbers = #tpu.dot_dimension_numbers<[1], [0], [0], [1], [0, 0, 1, 1], [], []>} : vector<8x8xbf16>, vector<8x32xbf16>, vector<8x32xf32> -> vector<8x32xf32>
    %125 = arith.addf %101, %124 : vector<8x32xf32>
    %c0_62 = arith.constant 0 : index
    %c0_63 = arith.constant 0 : index
    %126 = vector.load %arg12[%c0_62, %c0_63] : memref<1x32xf32, #tpu.memory_space<vmem>>, vector<1x32xf32>
    %127 = vector.broadcast %126 : vector<1x32xf32> to vector<8x32xf32>
    %128 = arith.addf %125, %127 : vector<8x32xf32>
    %c0_64 = arith.constant 0 : index
    %c0_65 = arith.constant 0 : index
    %c0_66 = arith.constant 0 : index
    %129 = vector.load %arg13[%c0_64, %c0_65, %c0_66] : memref<1x8x32xf32, #tpu.memory_space<vmem>>, vector<1x8x32xf32>
    %130 = vector.shape_cast %129 : vector<1x8x32xf32> to vector<8x32xf32>
    %131 = vector.shape_cast %128 : vector<8x32xf32> to vector<1x8x32xf32>
    tpu.vector_store %arg13[%c0_64, %c0_65, %c0_66], %131 {strides = array<i32>} : memref<1x8x32xf32, #tpu.memory_space<vmem>>, vector<1x8x32xf32>,
    return
  }
  func.func @transform_0(%arg0: i32, %arg1: i32) -> (i32, i32, i32) {
    %c0_i32 = arith.constant 0 : i32
    %c0_i32_0 = arith.constant 0 : i32
    return %arg0, %arg1, %c0_i32 : i32, i32, i32
  }
  func.func @transform_1(%arg0: i32, %arg1: i32) -> (i32, i32, i32) {
    %c0_i32 = arith.constant 0 : i32
    %c0_i32_0 = arith.constant 0 : i32
    %c0_i32_1 = arith.constant 0 : i32
    return %arg0, %c0_i32, %c0_i32_0 : i32, i32, i32
  }
  func.func @transform_2(%arg0: i32, %arg1: i32) -> (i32, i32, i32) {
    %c0_i32 = arith.constant 0 : i32
    %c0_i32_0 = arith.constant 0 : i32
    %c0_i32_1 = arith.constant 0 : i32
    return %arg0, %c0_i32, %c0_i32_0 : i32, i32, i32
  }
  func.func @transform_3(%arg0: i32, %arg1: i32) -> (i32, i32) {
    %c0_i32 = arith.constant 0 : i32
    %c0_i32_0 = arith.constant 0 : i32
    %c0_i32_1 = arith.constant 0 : i32
    return %c0_i32, %c0_i32_0 : i32, i32
  }
  func.func @transform_4(%arg0: i32, %arg1: i32) -> (i32, i32) {
    %c0_i32 = arith.constant 0 : i32
    %c0_i32_0 = arith.constant 0 : i32
    %c0_i32_1 = arith.constant 0 : i32
    return %c0_i32, %c0_i32_0 : i32, i32
  }
  func.func @transform_5(%arg0: i32, %arg1: i32) -> (i32, i32) {
    %c0_i32 = arith.constant 0 : i32
    %c0_i32_0 = arith.constant 0 : i32
    %c0_i32_1 = arith.constant 0 : i32
    return %c0_i32, %c0_i32_0 : i32, i32
  }
  func.func @transform_6(%arg0: i32, %arg1: i32) -> (i32, i32) {
    %c0_i32 = arith.constant 0 : i32
    %c0_i32_0 = arith.constant 0 : i32
    %c0_i32_1 = arith.constant 0 : i32
    return %c0_i32, %c0_i32_0 : i32, i32
  }
  func.func @transform_7(%arg0: i32, %arg1: i32) -> (i32, i32) {
    %c0_i32 = arith.constant 0 : i32
    %c0_i32_0 = arith.constant 0 : i32
    %c0_i32_1 = arith.constant 0 : i32
    return %c0_i32, %c0_i32_0 : i32, i32
  }
  func.func @transform_8(%arg0: i32, %arg1: i32) -> (i32, i32) {
    %c0_i32 = arith.constant 0 : i32
    %c0_i32_0 = arith.constant 0 : i32
    %c0_i32_1 = arith.constant 0 : i32
    return %c0_i32, %c0_i32_0 : i32, i32
  }
  func.func @transform_9(%arg0: i32, %arg1: i32) -> (i32, i32) {
    %c0_i32 = arith.constant 0 : i32
    %c0_i32_0 = arith.constant 0 : i32
    %c0_i32_1 = arith.constant 0 : i32
    return %c0_i32, %c0_i32_0 : i32, i32
  }
  func.func @transform_10(%arg0: i32, %arg1: i32) -> (i32, i32) {
    %c0_i32 = arith.constant 0 : i32
    %c0_i32_0 = arith.constant 0 : i32
    %c0_i32_1 = arith.constant 0 : i32
    return %c0_i32, %c0_i32_0 : i32, i32
  }
  func.func @transform_11(%arg0: i32, %arg1: i32) -> (i32, i32, i32) {
    %c0_i32 = arith.constant 0 : i32
    %c0_i32_0 = arith.constant 0 : i32
    return %arg0, %arg1, %c0_i32 : i32, i32, i32
  }
  func.func @transform_12(%arg0: i32, %arg1: i32) -> (i32, i32, i32, i32) {
    %c0_i32 = arith.constant 0 : i32
    %c0_i32_0 = arith.constant 0 : i32
    %c0_i32_1 = arith.constant 0 : i32
    return %arg0, %c0_i32, %arg1, %c0_i32_0 : i32, i32, i32, i32
  }
}

</mosaic_0001>

<llo_original>
// kernel: tpu_custom_call.1
$region0: #{tpu_custom_call.1}
  #allocation0 [shape = 'u32[]', space=smem, size = 0x4, offset = 0x4, fixed_abs, tag = 'smem constant byte address 0x4 - core index']
  #allocation1 [shape = 'u32[144,128]{1,0:T(1,128)}', space=vmem, size = 0x12000, scoped, tag = 'internal scratch']
  %s0 = inlined_call_operand.hbm [shape: f32[2,8,32], index: 0, kind: input, shape index: {}]
  %s1 = inlined_call_operand.hbm [shape: f32[2,8,32], index: 1, kind: input, shape index: {}]
  %s2 = inlined_call_operand.hbm [shape: f32[2,8,32], index: 2, kind: input, shape index: {}]
  %s3 = inlined_call_operand.hbm [shape: bf16[32,32], index: 3, kind: input, shape index: {}]
  %s4 = inlined_call_operand.hbm [shape: f32[1,32], index: 4, kind: input, shape index: {}]
  %s5 = inlined_call_operand.hbm [shape: bf16[32,32], index: 5, kind: input, shape index: {}]
  %s6 = inlined_call_operand.hbm [shape: f32[1,32], index: 6, kind: input, shape index: {}]
  %s7 = inlined_call_operand.hbm [shape: bf16[32,32], index: 7, kind: input, shape index: {}]
  %s8 = inlined_call_operand.hbm [shape: f32[1,32], index: 8, kind: input, shape index: {}]
  %s9 = inlined_call_operand.vmem [shape: bf16[32,32], index: 9, kind: input, shape index: {}]
  %s10 = inlined_call_operand.vmem [shape: f32[1,32], index: 10, kind: input, shape index: {}]
  %s11 = inlined_call_operand.hbm [shape: f32[2,8,32], index: 11, kind: output, shape index: {0}]
  %s12 = inlined_call_operand.hbm [shape: bf16[2,4,8,8], index: 12, kind: output, shape index: {1}]
  %13 = xla_tuple %s11, %s12
  %s14 = sld [smem:[#allocation0]]
  $region121: #{tpu_custom_call.1} parent=0
    _
  %s16 = ssub.s32 1, %s14
  %s17 = scalar_select 0, %s16, %s14
  $region1: #{tpu_custom_call.1} parent=0
    #allocation2 [shape = 'u8[8192]{0}', space=vmem, size = 0x2000, scoped, tag = 'input window, operand 0']
    #allocation3 [shape = 's32[2]{0}', space=sflag, size = 0x8, scoped, tag = 'scoped memory for tpu_custom_call.1']
    #allocation4 [shape = 's32[2]{0}', space=sflag, size = 0x8, scoped, tag = 'scoped memory for tpu_custom_call.1']
    #allocation5 [shape = 'u8[8192]{0}', space=vmem, size = 0x2000, scoped, tag = 'input window, operand 1']
    #allocation6 [shape = 's32[2]{0}', space=sflag, size = 0x8, scoped, tag = 'scoped memory for tpu_custom_call.1']
    #allocation7 [shape = 'u8[8192]{0}', space=vmem, size = 0x2000, scoped, tag = 'input window, operand 2']
    #allocation8 [shape = 'u8[8192]{0}', space=vmem, size = 0x2000, scoped, tag = 'input window, operand 3, single buffered']
    #allocation9 [shape = 's32[1]{0}', space=sflag, size = 0x4, scoped, tag = 'scoped memory for tpu_custom_call.1']
    #allocation10 [shape = 'u8[512]{0}', space=vmem, size = 0x400, scoped, tag = 'input window, operand 4, single buffered']
    #allocation11 [shape = 'u8[8192]{0}', space=vmem, size = 0x2000, scoped, tag = 'input window, operand 5, single buffered']
    #allocation12 [shape = 's32[1]{0}', space=sflag, size = 0x4, scoped, tag = 'scoped memory for tpu_custom_call.1']
    #allocation13 [shape = 'u8[512]{0}', space=vmem, size = 0x400, scoped, tag = 'input window, operand 6, single buffered']
    #allocation14 [shape = 'u8[8192]{0}', space=vmem, size = 0x2000, scoped, tag = 'input window, operand 7, single buffered']
    #allocation15 [shape = 's32[1]{0}', space=sflag, size = 0x4, scoped, tag = 'scoped memory for tpu_custom_call.1']
    #allocation16 [shape = 'u8[512]{0}', space=vmem, size = 0x400, scoped, tag = 'input window, operand 8, single buffered']
    #allocation17 [shape = 'u8[8192]{0}', space=vmem, size = 0x2000, scoped, tag = 'output window, operand 0']
    #allocation18 [shape = 'u8[16384]{0}', space=vmem, size = 0x4000, scoped, tag = 'output window, operand 1']
    #allocation19 [shape = 's32[2]{0}', space=sflag, size = 0x8, scoped, tag = 'scoped memory for tpu_custom_call.1']
    %18 = vsyncpa [#allocation3], 0
    %s19 = scalar_lea.sflag [#allocation3], 1
    %20 = vsyncpa %s19, 0
    %21 = vsyncpa [#allocation6], 0
    %s22 = scalar_lea.sflag [#allocation6], 1
    %23 = vsyncpa %s22, 0
    %24 = vsyncpa [#allocation9], 0
    %25 = vsyncpa [#allocation12], 0
    %26 = vsyncpa [#allocation15], 0
    %27 = vsyncpa [#allocation4], 0
    %s28 = scalar_lea.sflag [#allocation4], 1
    %29 = vsyncpa %s28, 0
    %30 = vsyncpa [#allocation19], 0
    %s31 = scalar_lea.sflag [#allocation19], 1
    %32 = vsyncpa %s31, 0
    loop: start=0, step=1, limit=4
    $region2: #{tpu_custom_call.1} parent=1 // loop_pre_header
      _
    $region3: #{tpu_custom_call.1} parent=1 // loop_header
      %s34 = sphi 0, %s38
      %p35 = scmp.ge.s32.totalorder %s34, 4
      %s41 = sphi 0, %s53
      %s42 = sphi 0, %s49
      %s43 = sphi 0, %s41
      %s44 = sphi 0, %s42
      %s45 = sphi 0, %s43
      %s46 = sphi 0, %s44
      %s58 = sphi 0, %s60
      %s61 = sphi 0, %s58
      %s62 = sphi 0, %s61
      %s78 = sphi 0, %s62
      %s84 = sphi 0, %s86
      %s87 = sphi 0, %s84
      %s88 = sphi 0, %s87
      %s104 = sphi 0, %s88
      %s110 = sphi 0, %s112
      %s113 = sphi 0, %s110
      %s114 = sphi 0, %s113
      %s130 = sphi 0, %s114
      %s134 = sphi 0, %s134
      %s136 = sphi 0, %s134
      %s137 = sphi 0, %s136
      %s151 = sphi 0, %s137
      %s155 = sphi 0, %s155
      %s157 = sphi 0, %s155
      %s158 = sphi 0, %s157
      %s172 = sphi 0, %s158
      %s176 = sphi 0, %s176
      %s178 = sphi 0, %s176
      %s179 = sphi 0, %s178
      %s193 = sphi 0, %s179
      %s197 = sphi 0, %s197
      %s199 = sphi 0, %s197
      %s200 = sphi 0, %s199
      %s214 = sphi 0, %s200
      %s218 = sphi 0, %s218
      %s220 = sphi 0, %s218
      %s221 = sphi 0, %s220
      %s235 = sphi 0, %s221
      %s239 = sphi 0, %s239
      %s241 = sphi 0, %s239
      %s242 = sphi 0, %s241
      %s256 = sphi 0, %s242
      %s260 = sphi 0, %s260
      %s262 = sphi 0, %s260
      %s263 = sphi 0, %s262
      %s277 = sphi 0, %s263
      %s281 = sphi 0, %s281
      %s283 = sphi 0, %s281
      %s284 = sphi 0, %s283
      %s298 = sphi 0, %s284
      %s306 = sphi 0, %s308
      %s309 = sphi 0, %s306
      %s310 = sphi 0, %s309
      %s326 = sphi 0, %s310
      %s334 = sphi 0, %s336
      %s337 = sphi 0, %s334
      %s338 = sphi 0, %s337
      %s354 = sphi 0, %s338
    $region4: #{tpu_custom_call.1} parent=1 // loop_header_branch
      %37 = sbr.rel (%p35) target = $region8
    $region5: #{tpu_custom_call.1} parent=1 // loop_body
      %s39 = ssub.s32 %s34, 1
      %s40 = ssub.s32 %s34, 2
      %s47 = sadd.s32 1, %s42
      %p48 = scmp.ge.s32.totalorder %s47, 1
      %s49 = scalar_select %p48, 0, %s47
      %s50 = sadd.s32 1, %s41
      %s51 = scalar_select %p48, %s50, %s41
      %p52 = scmp.ge.s32.totalorder %s51, 2
      %s53 = scalar_select %p52, 0, %s51
      %s54 = ssub.s32 %s41, %s53
      %s55 = ssub.s32 %s42, %s49
      %s56 = sor.u32 %s54, %s55
      %p57 = scmp.eq.s32.totalorder %s56, 0
      %s59 = sadd.s32 %s58, 1
      %s60 = scalar_select %p57, %s58, %s59
      %p63 = pneg %p57
      %p64 = scmp.eq.s32.totalorder %s34, 1
      %p65 = por %p63, %p64
      %p66 = scmp.ne.s32.totalorder %s58, %s61
      %p67 = scmp.eq.s32.totalorder %s34, 0
      %p68 = por %p66, %p67
      %p69 = scmp.ne.s32.totalorder %s58, %s61
      %p70 = scmp.eq.s32.totalorder %s39, 1
      %p71 = por %p69, %p70
      %p72 = scmp.ne.s32.totalorder %s61, %s62
      %p73 = scmp.eq.s32.totalorder %s39, 0
      %p74 = por %p72, %p73
      %p75 = scmp.ne.s32.totalorder %s61, %s62
      %p76 = scmp.eq.s32.totalorder %s40, 1
      %p77 = por %p75, %p76
      %p79 = scmp.ne.s32.totalorder %s62, %s78
      %p80 = scmp.eq.s32.totalorder %s40, 0
      %p81 = por %p79, %p80
      %s82 = ssub.s32 %s41, %s53
      %p83 = scmp.eq.s32.totalorder %s82, 0
      %s85 = sadd.s32 %s84, 1
      %s86 = scalar_select %p83, %s84, %s85
      %p89 = pneg %p83
      %p90 = scmp.eq.s32.totalorder %s34, 1
      %p91 = por %p89, %p90
      %p92 = scmp.ne.s32.totalorder %s84, %s87
      %p93 = scmp.eq.s32.totalorder %s34, 0
      %p94 = por %p92, %p93
      %p95 = scmp.ne.s32.totalorder %s84, %s87
      %p96 = scmp.eq.s32.totalorder %s39, 1
      %p97 = por %p95, %p96
      %p98 = scmp.ne.s32.totalorder %s87, %s88
      %p99 = scmp.eq.s32.totalorder %s39, 0
      %p100 = por %p98, %p99
      %p101 = scmp.ne.s32.totalorder %s87, %s88
      %p102 = scmp.eq.s32.totalorder %s40, 1
      %p103 = por %p101, %p102
      %p105 = scmp.ne.s32.totalorder %s88, %s104
      %p106 = scmp.eq.s32.totalorder %s40, 0
      %p107 = por %p105, %p106
      %s108 = ssub.s32 %s41, %s53
      %p109 = scmp.eq.s32.totalorder %s108, 0
      %s111 = sadd.s32 %s110, 1
      %s112 = scalar_select %p109, %s110, %s111
      %p115 = pneg %p109
      %p116 = scmp.eq.s32.totalorder %s34, 1
      %p117 = por %p115, %p116
      %p118 = scmp.ne.s32.totalorder %s110, %s113
      %p119 = scmp.eq.s32.totalorder %s34, 0
      %p120 = por %p118, %p119
      %p121 = scmp.ne.s32.totalorder %s110, %s113
      %p122 = scmp.eq.s32.totalorder %s39, 1
      %p123 = por %p121, %p122
      %p124 = scmp.ne.s32.totalorder %s113, %s114
      %p125 = scmp.eq.s32.totalorder %s39, 0
      %p126 = por %p124, %p125
      %p127 = scmp.ne.s32.totalorder %s113, %s114
      %p128 = scmp.eq.s32.totalorder %s40, 1
      %p129 = por %p127, %p128
      %p131 = scmp.ne.s32.totalorder %s114, %s130
      %p132 = scmp.eq.s32.totalorder %s40, 0
      %p133 = por %p131, %p132
      %s135 = sadd.s32 %s134, 1
      %p138 = scmp.eq.s32.totalorder %s34, 1
      %p139 = scmp.ne.s32.totalorder %s134, %s136
      %p140 = scmp.eq.s32.totalorder %s34, 0
      %p141 = por %p139, %p140
      %p142 = scmp.ne.s32.totalorder %s134, %s136
      %p143 = scmp.eq.s32.totalorder %s39, 1
      %p144 = por %p142, %p143
      %p145 = scmp.ne.s32.totalorder %s136, %s137
      %p146 = scmp.eq.s32.totalorder %s39, 0
      %p147 = por %p145, %p146
      %p148 = scmp.ne.s32.totalorder %s136, %s137
      %p149 = scmp.eq.s32.totalorder %s40, 1
      %p150 = por %p148, %p149
      %p152 = scmp.ne.s32.totalorder %s137, %s151
      %p153 = scmp.eq.s32.totalorder %s40, 0
      %p154 = por %p152, %p153
      %s156 = sadd.s32 %s155, 1
      %p159 = scmp.eq.s32.totalorder %s34, 1
      %p160 = scmp.ne.s32.totalorder %s155, %s157
      %p161 = scmp.eq.s32.totalorder %s34, 0
      %p162 = por %p160, %p161
      %p163 = scmp.ne.s32.totalorder %s155, %s157
      %p164 = scmp.eq.s32.totalorder %s39, 1
      %p165 = por %p163, %p164
      %p166 = scmp.ne.s32.totalorder %s157, %s158
      %p167 = scmp.eq.s32.totalorder %s39, 0
      %p168 = por %p166, %p167
      %p169 = scmp.ne.s32.totalorder %s157, %s158
      %p170 = scmp.eq.s32.totalorder %s40, 1
      %p171 = por %p169, %p170
      %p173 = scmp.ne.s32.totalorder %s158, %s172
      %p174 = scmp.eq.s32.totalorder %s40, 0
      %p175 = por %p173, %p174
      %s177 = sadd.s32 %s176, 1
      %p180 = scmp.eq.s32.totalorder %s34, 1
      %p181 = scmp.ne.s32.totalorder %s176, %s178
      %p182 = scmp.eq.s32.totalorder %s34, 0
      %p183 = por %p181, %p182
      %p184 = scmp.ne.s32.totalorder %s176, %s178
      %p185 = scmp.eq.s32.totalorder %s39, 1
      %p186 = por %p184, %p185
      %p187 = scmp.ne.s32.totalorder %s178, %s179
      %p188 = scmp.eq.s32.totalorder %s39, 0
      %p189 = por %p187, %p188
      %p190 = scmp.ne.s32.totalorder %s178, %s179
      %p191 = scmp.eq.s32.totalorder %s40, 1
      %p192 = por %p190, %p191
      %p194 = scmp.ne.s32.totalorder %s179, %s193
      %p195 = scmp.eq.s32.totalorder %s40, 0
      %p196 = por %p194, %p195
      %s198 = sadd.s32 %s197, 1
      %p201 = scmp.eq.s32.totalorder %s34, 1
      %p202 = scmp.ne.s32.totalorder %s197, %s199
      %p203 = scmp.eq.s32.totalorder %s34, 0
      %p204 = por %p202, %p203
      %p205 = scmp.ne.s32.totalorder %s197, %s199
      %p206 = scmp.eq.s32.totalorder %s39, 1
      %p207 = por %p205, %p206
      %p208 = scmp.ne.s32.totalorder %s199, %s200
      %p209 = scmp.eq.s32.totalorder %s39, 0
      %p210 = por %p208, %p209
      %p211 = scmp.ne.s32.totalorder %s199, %s200
      %p212 = scmp.eq.s32.totalorder %s40, 1
      %p213 = por %p211, %p212
      %p215 = scmp.ne.s32.totalorder %s200, %s214
      %p216 = scmp.eq.s32.totalorder %s40, 0
      %p217 = por %p215, %p216
      %s219 = sadd.s32 %s218, 1
      %p222 = scmp.eq.s32.totalorder %s34, 1
      %p223 = scmp.ne.s32.totalorder %s218, %s220
      %p224 = scmp.eq.s32.totalorder %s34, 0
      %p225 = por %p223, %p224
      %p226 = scmp.ne.s32.totalorder %s218, %s220
      %p227 = scmp.eq.s32.totalorder %s39, 1
      %p228 = por %p226, %p227
      %p229 = scmp.ne.s32.totalorder %s220, %s221
      %p230 = scmp.eq.s32.totalorder %s39, 0
      %p231 = por %p229, %p230
      %p232 = scmp.ne.s32.totalorder %s220, %s221
      %p233 = scmp.eq.s32.totalorder %s40, 1
      %p234 = por %p232, %p233
      %p236 = scmp.ne.s32.totalorder %s221, %s235
      %p237 = scmp.eq.s32.totalorder %s40, 0
      %p238 = por %p236, %p237
      %s240 = sadd.s32 %s239, 1
      %p243 = scmp.eq.s32.totalorder %s34, 1
      %p244 = scmp.ne.s32.totalorder %s239, %s241
      %p245 = scmp.eq.s32.totalorder %s34, 0
      %p246 = por %p244, %p245
      %p247 = scmp.ne.s32.totalorder %s239, %s241
      %p248 = scmp.eq.s32.totalorder %s39, 1
      %p249 = por %p247, %p248
      %p250 = scmp.ne.s32.totalorder %s241, %s242
      %p251 = scmp.eq.s32.totalorder %s39, 0
      %p252 = por %p250, %p251
      %p253 = scmp.ne.s32.totalorder %s241, %s242
      %p254 = scmp.eq.s32.totalorder %s40, 1
      %p255 = por %p253, %p254
      %p257 = scmp.ne.s32.totalorder %s242, %s256
      %p258 = scmp.eq.s32.totalorder %s40, 0
      %p259 = por %p257, %p258
      %s261 = sadd.s32 %s260, 1
      %p264 = scmp.eq.s32.totalorder %s34, 1
      %p265 = scmp.ne.s32.totalorder %s260, %s262
      %p266 = scmp.eq.s32.totalorder %s34, 0
      %p267 = por %p265, %p266
      %p268 = scmp.ne.s32.totalorder %s260, %s262
      %p269 = scmp.eq.s32.totalorder %s39, 1
      %p270 = por %p268, %p269
      %p271 = scmp.ne.s32.totalorder %s262, %s263
      %p272 = scmp.eq.s32.totalorder %s39, 0
      %p273 = por %p271, %p272
      %p274 = scmp.ne.s32.totalorder %s262, %s263
      %p275 = scmp.eq.s32.totalorder %s40, 1
      %p276 = por %p274, %p275
      %p278 = scmp.ne.s32.totalorder %s263, %s277
      %p279 = scmp.eq.s32.totalorder %s40, 0
      %p280 = por %p278, %p279
      %s282 = sadd.s32 %s281, 1
      %p285 = scmp.eq.s32.totalorder %s34, 1
      %p286 = scmp.ne.s32.totalorder %s281, %s283
      %p287 = scmp.eq.s32.totalorder %s34, 0
      %p288 = por %p286, %p287
      %p289 = scmp.ne.s32.totalorder %s281, %s283
      %p290 = scmp.eq.s32.totalorder %s39, 1
      %p291 = por %p289, %p290
      %p292 = scmp.ne.s32.totalorder %s283, %s284
      %p293 = scmp.eq.s32.totalorder %s39, 0
      %p294 = por %p292, %p293
      %p295 = scmp.ne.s32.totalorder %s283, %s284
      %p296 = scmp.eq.s32.totalorder %s40, 1
      %p297 = por %p295, %p296
      %p299 = scmp.ne.s32.totalorder %s284, %s298
      %p300 = scmp.eq.s32.totalorder %s40, 0
      %p301 = por %p299, %p300
      %s302 = ssub.s32 %s41, %s53
      %s303 = ssub.s32 %s42, %s49
      %s304 = sor.u32 %s302, %s303
      %p305 = scmp.eq.s32.totalorder %s304, 0
      %s307 = sadd.s32 %s306, 1
      %s308 = scalar_select %p305, %s306, %s307
      %p311 = pneg %p305
      %p312 = scmp.eq.s32.totalorder %s34, 1
      %p313 = por %p311, %p312
      %p314 = scmp.ne.s32.totalorder %s306, %s309
      %p315 = scmp.eq.s32.totalorder %s34, 0
      %p316 = por %p314, %p315
      %p317 = scmp.ne.s32.totalorder %s306, %s309
      %p318 = scmp.eq.s32.totalorder %s39, 1
      %p319 = por %p317, %p318
      %p320 = scmp.ne.s32.totalorder %s309, %s310
      %p321 = scmp.eq.s32.totalorder %s39, 0
      %p322 = por %p320, %p321
      %p323 = scmp.ne.s32.totalorder %s309, %s310
      %p324 = scmp.eq.s32.totalorder %s40, 1
      %p325 = por %p323, %p324
      %p327 = scmp.ne.s32.totalorder %s310, %s326
      %p328 = scmp.eq.s32.totalorder %s40, 0
      %p329 = por %p327, %p328
      %s330 = ssub.s32 %s41, %s53
      %s331 = ssub.s32 %s42, %s49
      %s332 = sor.u32 %s330, %s331
      %p333 = scmp.eq.s32.totalorder %s332, 0
      %s335 = sadd.s32 %s334, 1
      %s336 = scalar_select %p333, %s334, %s335
      %p339 = pneg %p333
      %p340 = scmp.eq.s32.totalorder %s34, 1
      %p341 = por %p339, %p340
      %p342 = scmp.ne.s32.totalorder %s334, %s337
      %p343 = scmp.eq.s32.totalorder %s34, 0
      %p344 = por %p342, %p343
      %p345 = scmp.ne.s32.totalorder %s334, %s337
      %p346 = scmp.eq.s32.totalorder %s39, 1
      %p347 = por %p345, %p346
      %p348 = scmp.ne.s32.totalorder %s337, %s338
      %p349 = scmp.eq.s32.totalorder %s39, 0
      %p350 = por %p348, %p349
      %p351 = scmp.ne.s32.totalorder %s337, %s338
      %p352 = scmp.eq.s32.totalorder %s40, 1
      %p353 = por %p351, %p352
      %p355 = scmp.ne.s32.totalorder %s338, %s354
      %p356 = scmp.eq.s32.totalorder %s40, 0
      %p357 = por %p355, %p356
      %p358 = scmp.le.s32.totalorder 1, %s34
      %p359 = scmp.lt.s32.totalorder %s34, 3
      %p360 = pnand %p358, %p359
      %p361 = pneg %p360
      // Predicated region
      $region9: #{tpu_custom_call.1} parent=5 // pred_check
        _
      $region10: #{tpu_custom_call.1} parent=5 // pred_check_branch
        %363 = sbr.rel (%p360) target = $region12
      $region11: #{tpu_custom_call.1} parent=5 // pred_region
        %s364 = ssub.s32 %s34, 1
        // Predicated region
        $region13: #{tpu_custom_call.1} parent=11 // pred_check
          %p365 = pneg %p147
        $region14: #{tpu_custom_call.1} parent=11 // pred_check_branch
          %367 = sbr.rel (%p365) target = $region16
        $region15: #{tpu_custom_call.1} parent=11 // pred_region
          %s369 = ssub.s32 256, 256
          %370 = vsyncadd [#allocation9], %s369
          %s371 = sshll.u32 [#allocation8], 4
          %s372 = int_to_ptr.vmem [resolvable:$true] %s371
          %377 = dma.hbm_to_vmem [thread:$0]  %s3, 256, %s372, [#allocation9], 64, 64, 4
        $region16: #{tpu_custom_call.1} parent=11 // pred_fallthru
          _
        // Predicated region
        $region17: #{tpu_custom_call.1} parent=11 // pred_check
          %p378 = pneg %p168
        $region18: #{tpu_custom_call.1} parent=11 // pred_check_branch
          %380 = sbr.rel (%p378) target = $region20
        $region19: #{tpu_custom_call.1} parent=11 // pred_region
          %s382 = ssub.s32 16, 16
          %383 = vsyncadd [#allocation9], %s382
          %s385 = sshll.u32 [#allocation10], 4
          %s386 = int_to_ptr.vmem [resolvable:$true] %s385
          %388 = dma.hbm_to_vmem [thread:$0]  %s4, 16, %s386, [#allocation9]
        $region20: #{tpu_custom_call.1} parent=11 // pred_fallthru
          _
        // Predicated region
        $region21: #{tpu_custom_call.1} parent=11 // pred_check
          %p389 = pneg %p189
        $region22: #{tpu_custom_call.1} parent=11 // pred_check_branch
          %391 = sbr.rel (%p389) target = $region24
        $region23: #{tpu_custom_call.1} parent=11 // pred_region
          %s393 = ssub.s32 256, 256
          %394 = vsyncadd [#allocation12], %s393
          %s395 = sshll.u32 [#allocation11], 4
          %s396 = int_to_ptr.vmem [resolvable:$true] %s395
          %401 = dma.hbm_to_vmem [thread:$0]  %s5, 256, %s396, [#allocation12], 64, 64, 4
        $region24: #{tpu_custom_call.1} parent=11 // pred_fallthru
          _
        // Predicated region
        $region25: #{tpu_custom_call.1} parent=11 // pred_check
          %p402 = pneg %p210
        $region26: #{tpu_custom_call.1} parent=11 // pred_check_branch
          %404 = sbr.rel (%p402) target = $region28
        $region27: #{tpu_custom_call.1} parent=11 // pred_region
          %s406 = ssub.s32 16, 16
          %407 = vsyncadd [#allocation12], %s406
          %s409 = sshll.u32 [#allocation13], 4
          %s410 = int_to_ptr.vmem [resolvable:$true] %s409
          %412 = dma.hbm_to_vmem [thread:$0]  %s6, 16, %s410, [#allocation12]
        $region28: #{tpu_custom_call.1} parent=11 // pred_fallthru
          _
        // Predicated region
        $region29: #{tpu_custom_call.1} parent=11 // pred_check
          %p413 = pneg %p231
        $region30: #{tpu_custom_call.1} parent=11 // pred_check_branch
          %415 = sbr.rel (%p413) target = $region32
        $region31: #{tpu_custom_call.1} parent=11 // pred_region
          %s417 = ssub.s32 256, 256
          %418 = vsyncadd [#allocation15], %s417
          %s419 = sshll.u32 [#allocation14], 4
          %s420 = int_to_ptr.vmem [resolvable:$true] %s419
          %425 = dma.hbm_to_vmem [thread:$0]  %s7, 256, %s420, [#allocation15], 64, 64, 4
        $region32: #{tpu_custom_call.1} parent=11 // pred_fallthru
          _
        // Predicated region
        $region33: #{tpu_custom_call.1} parent=11 // pred_check
          %p426 = pneg %p252
        $region34: #{tpu_custom_call.1} parent=11 // pred_check_branch
          %428 = sbr.rel (%p426) target = $region36
        $region35: #{tpu_custom_call.1} parent=11 // pred_region
          %s430 = ssub.s32 16, 16
          %431 = vsyncadd [#allocation15], %s430
          %s433 = sshll.u32 [#allocation16], 4
          %s434 = int_to_ptr.vmem [resolvable:$true] %s433
          %436 = dma.hbm_to_vmem [thread:$0]  %s8, 16, %s434, [#allocation15]
        $region36: #{tpu_custom_call.1} parent=11 // pred_fallthru
          _
        // Predicated region
        $region37: #{tpu_custom_call.1} parent=11 // pred_check
          %p437 = pneg %p273
        $region38: #{tpu_custom_call.1} parent=11 // pred_check_branch
          %439 = sbr.rel (%p437) target = $region40
        $region39: #{tpu_custom_call.1} parent=11 // pred_region
          _
        $region40: #{tpu_custom_call.1} parent=11 // pred_fallthru
          _
        // Predicated region
        $region41: #{tpu_custom_call.1} parent=11 // pred_check
          %p440 = pneg %p294
        $region42: #{tpu_custom_call.1} parent=11 // pred_check_branch
          %442 = sbr.rel (%p440) target = $region44
        $region43: #{tpu_custom_call.1} parent=11 // pred_region
          _
        $region44: #{tpu_custom_call.1} parent=11 // pred_fallthru
          _
      $region12: #{tpu_custom_call.1} parent=5 // pred_fallthru
        _
      %p443 = scmp.lt.s32.totalorder %s34, 2
      // Predicated region
      $region45: #{tpu_custom_call.1} parent=5 // pred_check
        %p444 = pneg %p443
      $region46: #{tpu_custom_call.1} parent=5 // pred_check_branch
        %446 = sbr.rel (%p444) target = $region48
      $region47: #{tpu_custom_call.1} parent=5 // pred_region
        // Predicated region
        $region49: #{tpu_custom_call.1} parent=47 // pred_check
          %p447 = pneg %p68
        $region50: #{tpu_custom_call.1} parent=47 // pred_check_branch
          %449 = sbr.rel (%p447) target = $region52
        $region51: #{tpu_custom_call.1} parent=47 // pred_region
          %s450 = sand.u32 %s58, 1
          %s451 = scalar_lea.sflag [#allocation3], %s450
          %s452 = sand.u32 %s58, 1
          %s453 = smul.addr %s452, 8
          %s454 = scalar_lea.vmem [#allocation2], %s453
          %s456 = ssub.s32 128, 128
          %457 = vsyncadd %s451, %s456
          %s458 = sadd.s32 %s42, %s41
          %s459 = smul.addr %s458, 128
          %s460 = scalar_lea.hbm %s0, %s459
          %s462 = sshll.u32 %s454, 4
          %s463 = int_to_ptr.vmem [resolvable:$true] %s462
          %465 = dma.hbm_to_vmem [thread:$0]  %s460, 128, %s463, %s451
        $region52: #{tpu_custom_call.1} parent=47 // pred_fallthru
          _
        // Predicated region
        $region53: #{tpu_custom_call.1} parent=47 // pred_check
          %p466 = pneg %p94
        $region54: #{tpu_custom_call.1} parent=47 // pred_check_branch
          %468 = sbr.rel (%p466) target = $region56
        $region55: #{tpu_custom_call.1} parent=47 // pred_region
          %s469 = sand.u32 %s34, 1
          %s470 = scalar_lea.sflag [#allocation6], %s469
          %s471 = sand.u32 %s84, 1
          %s472 = smul.addr %s471, 8
          %s473 = scalar_lea.vmem [#allocation5], %s472
          %s475 = ssub.s32 128, 128
          %476 = vsyncadd %s470, %s475
          %s477 = smul.addr %s41, 128
          %s478 = scalar_lea.hbm %s1, %s477
          %s480 = sshll.u32 %s473, 4
          %s481 = int_to_ptr.vmem [resolvable:$true] %s480
          %483 = dma.hbm_to_vmem [thread:$0]  %s478, 128, %s481, %s470
        $region56: #{tpu_custom_call.1} parent=47 // pred_fallthru
          _
        // Predicated region
        $region57: #{tpu_custom_call.1} parent=47 // pred_check
          %p484 = pneg %p120
        $region58: #{tpu_custom_call.1} parent=47 // pred_check_branch
          %486 = sbr.rel (%p484) target = $region60
        $region59: #{tpu_custom_call.1} parent=47 // pred_region
          %s487 = sand.u32 %s34, 1
          %s488 = scalar_lea.sflag [#allocation6], %s487
          %s489 = sand.u32 %s110, 1
          %s490 = smul.addr %s489, 8
          %s491 = scalar_lea.vmem [#allocation7], %s490
          %s493 = ssub.s32 128, 128
          %494 = vsyncadd %s488, %s493
          %s495 = smul.addr %s41, 128
          %s496 = scalar_lea.hbm %s2, %s495
          %s498 = sshll.u32 %s491, 4
          %s499 = int_to_ptr.vmem [resolvable:$true] %s498
          %501 = dma.hbm_to_vmem [thread:$0]  %s496, 128, %s499, %s488
        $region60: #{tpu_custom_call.1} parent=47 // pred_fallthru
          _
      $region48: #{tpu_custom_call.1} parent=5 // pred_fallthru
        _
      %p502 = scmp.le.s32.totalorder 1, %s34
      %p503 = scmp.lt.s32.totalorder %s34, 3
      %p504 = pnand %p502, %p503
      %p505 = pneg %p504
      // Predicated region
      $region61: #{tpu_custom_call.1} parent=5 // pred_check
        _
      $region62: #{tpu_custom_call.1} parent=5 // pred_check_branch
        %507 = sbr.rel (%p504) target = $region64
      $region63: #{tpu_custom_call.1} parent=5 // pred_region
        %s508 = ssub.s32 %s34, 1
        %s509 = sand.u32 %s61, 1
        %s510 = scalar_lea.sflag [#allocation3], %s509
        %s511 = sand.u32 %s61, 1
        %s512 = smul.addr %s511, 8
        %s513 = scalar_lea.vmem [#allocation2], %s512
        // Predicated region
        $region65: #{tpu_custom_call.1} parent=63 // pred_check
          %p514 = pneg %p74
        $region66: #{tpu_custom_call.1} parent=63 // pred_check_branch
          %516 = sbr.rel (%p514) target = $region68
        $region67: #{tpu_custom_call.1} parent=63 // pred_region
          %517 = dma.done %s510, 128
        $region68: #{tpu_custom_call.1} parent=63 // pred_fallthru
          _
        %s518 = sand.u32 %s39, 1
        %s519 = scalar_lea.sflag [#allocation6], %s518
        %s520 = sand.u32 %s87, 1
        %s521 = smul.addr %s520, 8
        %s522 = scalar_lea.vmem [#allocation5], %s521
        // Predicated region
        $region69: #{tpu_custom_call.1} parent=63 // pred_check
          %p523 = pneg %p100
        $region70: #{tpu_custom_call.1} parent=63 // pred_check_branch
          %525 = sbr.rel (%p523) target = $region72
        $region71: #{tpu_custom_call.1} parent=63 // pred_region
          %526 = dma.done %s519, 128
        $region72: #{tpu_custom_call.1} parent=63 // pred_fallthru
          _
        %s527 = sand.u32 %s39, 1
        %s528 = scalar_lea.sflag [#allocation6], %s527
        %s529 = sand.u32 %s113, 1
        %s530 = smul.addr %s529, 8
        %s531 = scalar_lea.vmem [#allocation7], %s530
        // Predicated region
        $region73: #{tpu_custom_call.1} parent=63 // pred_check
          %p532 = pneg %p126
        $region74: #{tpu_custom_call.1} parent=63 // pred_check_branch
          %534 = sbr.rel (%p532) target = $region76
        $region75: #{tpu_custom_call.1} parent=63 // pred_region
          %535 = dma.done %s528, 128
        $region76: #{tpu_custom_call.1} parent=63 // pred_fallthru
          _
        // Predicated region
        $region77: #{tpu_custom_call.1} parent=63 // pred_check
          %p536 = pneg %p147
        $region78: #{tpu_custom_call.1} parent=63 // pred_check_branch
          %538 = sbr.rel (%p536) target = $region80
        $region79: #{tpu_custom_call.1} parent=63 // pred_region
          %539 = dma.done [#allocation9], 256
        $region80: #{tpu_custom_call.1} parent=63 // pred_fallthru
          _
        // Predicated region
        $region81: #{tpu_custom_call.1} parent=63 // pred_check
          %p540 = pneg %p168
        $region82: #{tpu_custom_call.1} parent=63 // pred_check_branch
          %542 = sbr.rel (%p540) target = $region84
        $region83: #{tpu_custom_call.1} parent=63 // pred_region
          %543 = dma.done [#allocation9], 16
        $region84: #{tpu_custom_call.1} parent=63 // pred_fallthru
          _
        // Predicated region
        $region85: #{tpu_custom_call.1} parent=63 // pred_check
          %p544 = pneg %p189
        $region86: #{tpu_custom_call.1} parent=63 // pred_check_branch
          %546 = sbr.rel (%p544) target = $region88
        $region87: #{tpu_custom_call.1} parent=63 // pred_region
          %547 = dma.done [#allocation12], 256
        $region88: #{tpu_custom_call.1} parent=63 // pred_fallthru
          _
        // Predicated region
        $region89: #{tpu_custom_call.1} parent=63 // pred_check
          %p548 = pneg %p210
        $region90: #{tpu_custom_call.1} parent=63 // pred_check_branch
          %550 = sbr.rel (%p548) target = $region92
        $region91: #{tpu_custom_call.1} parent=63 // pred_region
          %551 = dma.done [#allocation12], 16
        $region92: #{tpu_custom_call.1} parent=63 // pred_fallthru
          _
        // Predicated region
        $region93: #{tpu_custom_call.1} parent=63 // pred_check
          %p552 = pneg %p231
        $region94: #{tpu_custom_call.1} parent=63 // pred_check_branch
          %554 = sbr.rel (%p552) target = $region96
        $region95: #{tpu_custom_call.1} parent=63 // pred_region
          %555 = dma.done [#allocation15], 256
        $region96: #{tpu_custom_call.1} parent=63 // pred_fallthru
          _
        // Predicated region
        $region97: #{tpu_custom_call.1} parent=63 // pred_check
          %p556 = pneg %p252
        $region98: #{tpu_custom_call.1} parent=63 // pred_check_branch
          %558 = sbr.rel (%p556) target = $region100
        $region99: #{tpu_custom_call.1} parent=63 // pred_region
          %559 = dma.done [#allocation15], 16
        $region100: #{tpu_custom_call.1} parent=63 // pred_fallthru
          _
        %s560 = sand.u32 %s61, 1
        %s561 = scalar_lea.sflag [#allocation3], %s560
        %s562 = sand.u32 %s61, 1
        %s563 = smul.addr %s562, 8
        %s564 = scalar_lea.vmem [#allocation2], %s563
        %p565 = pneg %p74
        %p566 = pneg %p71
        %s567 = sand.u32 %s39, 1
        %s568 = scalar_lea.sflag [#allocation6], %s567
        %s569 = sand.u32 %s87, 1
        %s570 = smul.addr %s569, 8
        %s571 = scalar_lea.vmem [#allocation5], %s570
        %p572 = pneg %p100
        %p573 = pneg %p97
        %s574 = sand.u32 %s39, 1
        %s575 = scalar_lea.sflag [#allocation6], %s574
        %s576 = sand.u32 %s113, 1
        %s577 = smul.addr %s576, 8
        %s578 = scalar_lea.vmem [#allocation7], %s577
        %p579 = pneg %p126
        %p580 = pneg %p123
        %p581 = pneg %p147
        %p582 = pneg %p144
        %p583 = pneg %p168
        %p584 = pneg %p165
        %p585 = pneg %p189
        %p586 = pneg %p186
        %p587 = pneg %p210
        %p588 = pneg %p207
        %p589 = pneg %p231
        %p590 = pneg %p228
        %p591 = pneg %p252
        %p592 = pneg %p249
        %p593 = pneg %p273
        %p594 = pneg %p270
        %p595 = pneg %p294
        %p596 = pneg %p291
        %p597 = pneg %p322
        %p598 = pneg %p319
        %s599 = sand.u32 %s309, 1
        %s600 = scalar_lea.sflag [#allocation4], %s599
        %s601 = sand.u32 %s309, 1
        %s602 = smul.addr %s601, 8
        %s603 = scalar_lea.vmem [#allocation17], %s602
        %p604 = pneg %p350
        %p605 = pneg %p347
        %s606 = sand.u32 %s337, 1
        %s607 = scalar_lea.sflag [#allocation19], %s606
        %s608 = sand.u32 %s337, 1
        %s609 = smul.addr %s608, 16
        %s610 = scalar_lea.vmem [#allocation18], %s609
        %v612 = vld [vmem:[%s513] sm:$0xff]
        %v613 = vpack.c.bf16 %v612, %v612
        %v614 = vld [vmem:[%s522] sm:$0xff]
        %v615 = vpack.c.bf16 %v614, %v614
        %v616 = vld [vmem:[%s531] sm:$0xff]
        %v617 = vpack.c.bf16 %v616, %v616
        %v618 = vld [vmem:[#allocation8] sm:$0xf]
        %v619 = vld [vmem:[#allocation8 + $0x4] sm:$0xf]
        %v620 = vld [vmem:[#allocation8 + $0x8] sm:$0xf]
        %v621 = vld [vmem:[#allocation8 + $0xc] sm:$0xf]
        %v622 = vld [vmem:[#allocation10] sm:$0x1]
        %v624 = vlaneseq
        %v625 = vshrl.u32 %v624, 7
        %v626 = vsub.s32 0, %v625
        %v627 = vrot.slane %v622, %v626
        %v633 = vunpack.c.l.b16 %v618
        %v634 = vunpack.c.l.b16 %v619
        %v635 = vunpack.c.l.b16 %v620
        %v636 = vunpack.c.l.b16 %v621
        %v637 = vpack.c.b16 %v634, %v633
        %v638 = vpack.c.b16 %v636, %v635
        %vm641 = vcmask 261120
        %v643 = vsel %vm641, %v613, 0
        %645 = vmatprep.subr.bf16.mxu0 0
        %646 = vmatpush1.bf16.msra.mxu0 0
        %647 = vmatprep.subr.bf16.mxu0 0
        %648 = vmatpush1.bf16.msra.mxu0 0
        %649 = vmatprep.subr.bf16.mxu0 0
        %650 = vmatpush1.bf16.msra.mxu0 0
        %651 = vmatprep.subr.bf16.mxu0 0
        %652 = vmatpush1.bf16.msra.mxu0 0
        %653 = vmatprep.subr.bf16.mxu0 0
        %654 = vmatpush1.bf16.msra.mxu0 0
        %655 = vmatprep.subr.bf16.mxu0 0
        %656 = vmatpush1.bf16.msra.mxu0 0
        %657 = vmatprep.subr.bf16.mxu0 0
        %658 = vmatpush1.bf16.msra.mxu0 %v638
        %659 = vmatprep.subr.bf16.mxu0 0
        %660 = vmatpush1.bf16.msra.mxu0 %v637
        %661 = vmatprep.subr.bf16.mxu0 0
        %662 = vmatpush2.bf16.msra.mxu0 0
        %663 = vmatprep.subr.bf16.mxu0 0
        %664 = vmatpush2.bf16.msra.mxu0 0
        %665 = vmatprep.subr.bf16.mxu0 0
        %666 = vmatpush2.bf16.msra.mxu0 0
        %667 = vmatprep.subr.bf16.mxu0 0
        %668 = vmatpush2.bf16.msra.mxu0 0
        %669 = vmatprep.subr.bf16.mxu0 0
        %670 = vmatpush2.bf16.msra.mxu0 0
        %671 = vmatprep.subr.bf16.mxu0 0
        %672 = vmatpush2.bf16.msra.mxu0 0
        %673 = vmatprep.subr.bf16.mxu0 0
        %674 = vmatpush2.bf16.msra.mxu0 0
        %675 = vmatprep.subr.bf16.mxu0 0
        %676 = vmatpush2.bf16.msra.mxu0 0
        %677 = vmatprep.mubr.bf16.mxu0 0
        %678 = vmatmul.mubr.bf16.gmra.mxu0 %v643
        %v679 = vpop.f32.mrf.mxu0
        %v680 = vadd.f32 %v627, %v679
        %v681 = vpop.f32.mrf.mxu0
        %v682 = vpop.f32.mrf.mxu0
        %v683 = vpop.f32.mrf.mxu0
        %684 = vdwg.mxu0
        %v685 = vmul.f32 %v680, 0.35355338
        %v686 = vld [vmem:[#allocation11] sm:$0xf]
        %v687 = vld [vmem:[#allocation11 + $0x4] sm:$0xf]
        %v688 = vld [vmem:[#allocation11 + $0x8] sm:$0xf]
        %v689 = vld [vmem:[#allocation11 + $0xc] sm:$0xf]
        %v690 = vld [vmem:[#allocation13] sm:$0x1]
        %v692 = vlaneseq
        %v693 = vshrl.u32 %v692, 7
        %v694 = vsub.s32 0, %v693
        %v695 = vrot.slane %v690, %v694
        %v701 = vunpack.c.l.b16 %v686
        %v702 = vunpack.c.l.b16 %v687
        %v703 = vunpack.c.l.b16 %v688
        %v704 = vunpack.c.l.b16 %v689
        %v705 = vpack.c.b16 %v702, %v701
        %v706 = vpack.c.b16 %v704, %v703
        %v710 = vsel %vm641, %v615, 0
        %712 = vmatprep.subr.bf16.mxu0 0
        %713 = vmatpush1.bf16.msra.mxu0 0
        %714 = vmatprep.subr.bf16.mxu0 0
        %715 = vmatpush1.bf16.msra.mxu0 0
        %716 = vmatprep.subr.bf16.mxu0 0
        %717 = vmatpush1.bf16.msra.mxu0 0
        %718 = vmatprep.subr.bf16.mxu0 0
        %719 = vmatpush1.bf16.msra.mxu0 0
        %720 = vmatprep.subr.bf16.mxu0 0
        %721 = vmatpush1.bf16.msra.mxu0 0
        %722 = vmatprep.subr.bf16.mxu0 0
        %723 = vmatpush1.bf16.msra.mxu0 0
        %724 = vmatprep.subr.bf16.mxu0 0
        %725 = vmatpush1.bf16.msra.mxu0 %v706
        %726 = vmatprep.subr.bf16.mxu0 0
        %727 = vmatpush1.bf16.msra.mxu0 %v705
        %728 = vmatprep.subr.bf16.mxu0 0
        %729 = vmatpush2.bf16.msra.mxu0 0
        %730 = vmatprep.subr.bf16.mxu0 0
        %731 = vmatpush2.bf16.msra.mxu0 0
        %732 = vmatprep.subr.bf16.mxu0 0
        %733 = vmatpush2.bf16.msra.mxu0 0
        %734 = vmatprep.subr.bf16.mxu0 0
        %735 = vmatpush2.bf16.msra.mxu0 0
        %736 = vmatprep.subr.bf16.mxu0 0
        %737 = vmatpush2.bf16.msra.mxu0 0
        %738 = vmatprep.subr.bf16.mxu0 0
        %739 = vmatpush2.bf16.msra.mxu0 0
        %740 = vmatprep.subr.bf16.mxu0 0
        %741 = vmatpush2.bf16.msra.mxu0 0
        %742 = vmatprep.subr.bf16.mxu0 0
        %743 = vmatpush2.bf16.msra.mxu0 0
        %744 = vmatprep.mubr.bf16.mxu0 0
        %745 = vmatmul.mubr.bf16.gmra.mxu0 %v710
        %v746 = vpop.f32.mrf.mxu0
        %v747 = vadd.f32 %v695, %v746
        %v748 = vpop.f32.mrf.mxu0
        %v749 = vpop.f32.mrf.mxu0
        %v750 = vpop.f32.mrf.mxu0
        %751 = vdwg.mxu0
        %v752 = vld [vmem:[#allocation14] sm:$0xf]
        %v753 = vld [vmem:[#allocation14 + $0x4] sm:$0xf]
        %v754 = vld [vmem:[#allocation14 + $0x8] sm:$0xf]
        %v755 = vld [vmem:[#allocation14 + $0xc] sm:$0xf]
        %v756 = vld [vmem:[#allocation16] sm:$0x1]
        %v758 = vlaneseq
        %v759 = vshrl.u32 %v758, 7
        %v760 = vsub.s32 0, %v759
        %v761 = vrot.slane %v756, %v760
        %v767 = vunpack.c.l.b16 %v752
        %v768 = vunpack.c.l.b16 %v753
        %v769 = vunpack.c.l.b16 %v754
        %v770 = vunpack.c.l.b16 %v755
        %v771 = vpack.c.b16 %v768, %v767
        %v772 = vpack.c.b16 %v770, %v769
        %v776 = vsel %vm641, %v617, 0
        %778 = vmatprep.subr.bf16.mxu0 0
        %779 = vmatpush1.bf16.msra.mxu0 0
        %780 = vmatprep.subr.bf16.mxu0 0
        %781 = vmatpush1.bf16.msra.mxu0 0
        %782 = vmatprep.subr.bf16.mxu0 0
        %783 = vmatpush1.bf16.msra.mxu0 0
        %784 = vmatprep.subr.bf16.mxu0 0
        %785 = vmatpush1.bf16.msra.mxu0 0
        %786 = vmatprep.subr.bf16.mxu0 0
        %787 = vmatpush1.bf16.msra.mxu0 0
        %788 = vmatprep.subr.bf16.mxu0 0
        %789 = vmatpush1.bf16.msra.mxu0 0
        %790 = vmatprep.subr.bf16.mxu0 0
        %791 = vmatpush1.bf16.msra.mxu0 %v772
        %792 = vmatprep.subr.bf16.mxu0 0
        %793 = vmatpush1.bf16.msra.mxu0 %v771
        %794 = vmatprep.subr.bf16.mxu0 0
        %795 = vmatpush2.bf16.msra.mxu0 0
        %796 = vmatprep.subr.bf16.mxu0 0
        %797 = vmatpush2.bf16.msra.mxu0 0
        %798 = vmatprep.subr.bf16.mxu0 0
        %799 = vmatpush2.bf16.msra.mxu0 0
        %800 = vmatprep.subr.bf16.mxu0 0
        %801 = vmatpush2.bf16.msra.mxu0 0
        %802 = vmatprep.subr.bf16.mxu0 0
        %803 = vmatpush2.bf16.msra.mxu0 0
        %804 = vmatprep.subr.bf16.mxu0 0
        %805 = vmatpush2.bf16.msra.mxu0 0
        %806 = vmatprep.subr.bf16.mxu0 0
        %807 = vmatpush2.bf16.msra.mxu0 0
        %808 = vmatprep.subr.bf16.mxu0 0
        %809 = vmatpush2.bf16.msra.mxu0 0
        %810 = vmatprep.mubr.bf16.mxu0 0
        %811 = vmatmul.mubr.bf16.gmra.mxu0 %v776
        %v812 = vpop.f32.mrf.mxu0
        %v813 = vadd.f32 %v761, %v812
        %v814 = vpop.f32.mrf.mxu0
        %v815 = vpop.f32.mrf.mxu0
        %v816 = vpop.f32.mrf.mxu0
        %817 = vdwg.mxu0
        %v818 = vpack.c.bf16 %v685, %v685
        %v819 = vpack.c.bf16 %v747, %v747
        %v820 = vpack.c.bf16 %v813, %v813
        %vm821 = vcmask 64512
        %v823 = vsel %vm821, %v818, 0
        %v826 = vsel %vm821, %v819, 0
        %828 = vmatprep.subr.bf16.mxu0 0
        %829 = vmatpush1.bf16.xpose.msra.mxu0 0
        %830 = vmatprep.subr.bf16.mxu0 0
        %831 = vmatpush1.bf16.xpose.msra.mxu0 0
        %832 = vmatprep.subr.bf16.mxu0 0
        %833 = vmatpush1.bf16.xpose.msra.mxu0 0
        %834 = vmatprep.subr.bf16.mxu0 0
        %835 = vmatpush1.bf16.xpose.msra.mxu0 0
        %836 = vmatprep.subr.bf16.mxu0 0
        %837 = vmatpush1.bf16.xpose.msra.mxu0 0
        %838 = vmatprep.subr.bf16.mxu0 0
        %839 = vmatpush1.bf16.xpose.msra.mxu0 0
        %840 = vmatprep.subr.bf16.mxu0 0
        %841 = vmatpush1.bf16.xpose.msra.mxu0 0
        %842 = vmatprep.subr.bf16.mxu0 0
        %843 = vmatpush1.bf16.xpose.msra.mxu0 %v826
        %844 = vmatprep.subr.bf16.mxu0 0
        %845 = vmatpush2.bf16.xpose.msra.mxu0 0
        %846 = vmatprep.subr.bf16.mxu0 0
        %847 = vmatpush2.bf16.xpose.msra.mxu0 0
        %848 = vmatprep.subr.bf16.mxu0 0
        %849 = vmatpush2.bf16.xpose.msra.mxu0 0
        %850 = vmatprep.subr.bf16.mxu0 0
        %851 = vmatpush2.bf16.xpose.msra.mxu0 0
        %852 = vmatprep.subr.bf16.mxu0 0
        %853 = vmatpush2.bf16.xpose.msra.mxu0 0
        %854 = vmatprep.subr.bf16.mxu0 0
        %855 = vmatpush2.bf16.xpose.msra.mxu0 0
        %856 = vmatprep.subr.bf16.mxu0 0
        %857 = vmatpush2.bf16.xpose.msra.mxu0 0
        %858 = vmatprep.subr.bf16.mxu0 0
        %859 = vmatpush2.bf16.xpose.msra.mxu0 0
        %860 = vmatprep.mubr.bf16.mxu0 0
        %861 = vmatmul.mubr.bf16.gmra.mxu0 %v823
        %v862 = vpop.f32.mrf.mxu0
        %v863 = vadd.f32 0.0, %v862
        %v864 = vpop.f32.mrf.mxu0
        %v865 = vpop.f32.mrf.mxu0
        %v866 = vpop.f32.mrf.mxu0
        %867 = vdwg.mxu0
        %v868 = vsel %vm821, %v863, -inf
        %869 = vmax.xlane.f32.xlu0 %v868
        %v870 = vpop.xlane.xlu0 %869
        %v871 = vsub.f32 %v863, %v870
        %v872 = vmul.f32 %v871, 1.442695
        %v873 = vpow.pop %v872
        %v874 = vsel %vm821, %v873, 0.0
        %875 = vadd.xlane.f32.xlu0 %v874
        %v876 = vpop.xlane.xlu0 %875
        %v877 = vrcp.pop %v876
        %v878 = vmul.f32 %v873, %v877
        %v879 = vpack.c.bf16 %v878, %v878
        %vm880 = vcmask 60416
        %881 = vst.msk [vmem:[%s610] sm:$0xf] %vm880, %v879
        %v883 = vsel %vm821, %v879, 0
        %vm885 = vcmask 1043456
        %v887 = vsel %vm885, %v820, 0
        %889 = vmatprep.subr.bf16.mxu0 0
        %890 = vmatpush1.bf16.msra.mxu0 0
        %891 = vmatprep.subr.bf16.mxu0 0
        %892 = vmatpush1.bf16.msra.mxu0 0
        %893 = vmatprep.subr.bf16.mxu0 0
        %894 = vmatpush1.bf16.msra.mxu0 0
        %895 = vmatprep.subr.bf16.mxu0 0
        %896 = vmatpush1.bf16.msra.mxu0 0
        %897 = vmatprep.subr.bf16.mxu0 0
        %898 = vmatpush1.bf16.msra.mxu0 0
        %899 = vmatprep.subr.bf16.mxu0 0
        %900 = vmatpush1.bf16.msra.mxu0 0
        %901 = vmatprep.subr.bf16.mxu0 0
        %902 = vmatpush1.bf16.msra.mxu0 0
        %903 = vmatprep.subr.bf16.mxu0 0
        %904 = vmatpush1.bf16.msra.mxu0 %v887
        %905 = vmatprep.subr.bf16.mxu0 0
        %906 = vmatpush2.bf16.msra.mxu0 0
        %907 = vmatprep.subr.bf16.mxu0 0
        %908 = vmatpush2.bf16.msra.mxu0 0
        %909 = vmatprep.subr.bf16.mxu0 0
        %910 = vmatpush2.bf16.msra.mxu0 0
        %911 = vmatprep.subr.bf16.mxu0 0
        %912 = vmatpush2.bf16.msra.mxu0 0
        %913 = vmatprep.subr.bf16.mxu0 0
        %914 = vmatpush2.bf16.msra.mxu0 0
        %915 = vmatprep.subr.bf16.mxu0 0
        %916 = vmatpush2.bf16.msra.mxu0 0
        %917 = vmatprep.subr.bf16.mxu0 0
        %918 = vmatpush2.bf16.msra.mxu0 0
        %919 = vmatprep.subr.bf16.mxu0 0
        %920 = vmatpush2.bf16.msra.mxu0 0
        %921 = vmatprep.mubr.bf16.mxu0 0
        %922 = vmatmul.mubr.bf16.gmra.mxu0 %v883
        %v923 = vpop.f32.mrf.mxu0
        %v924 = vadd.f32 0.0, %v923
        %v925 = vpop.f32.mrf.mxu0
        %v926 = vpop.f32.mrf.mxu0
        %v927 = vpop.f32.mrf.mxu0
        %928 = vdwg.mxu0
        %v929 = vpack.c.bf16 %v924, %v924
        %v930 = vld [vmem:[%s9] sm:$0xf]
        %932 = vrot.lane.b32.xlu0 %v818, 120
        %v933 = vpop.permute.xlu0 %932
        %935 = vrot.lane.b32.xlu0 %v819, 120
        %v936 = vpop.permute.xlu0 %935
        %v938 = vsel %vm821, %v933, 0
        %v941 = vsel %vm821, %v936, 0
        %943 = vmatprep.subr.bf16.mxu0 0
        %944 = vmatpush1.bf16.xpose.msra.mxu0 0
        %945 = vmatprep.subr.bf16.mxu0 0
        %946 = vmatpush1.bf16.xpose.msra.mxu0 0
        %947 = vmatprep.subr.bf16.mxu0 0
        %948 = vmatpush1.bf16.xpose.msra.mxu0 0
        %949 = vmatprep.subr.bf16.mxu0 0
        %950 = vmatpush1.bf16.xpose.msra.mxu0 0
        %951 = vmatprep.subr.bf16.mxu0 0
        %952 = vmatpush1.bf16.xpose.msra.mxu0 0
        %953 = vmatprep.subr.bf16.mxu0 0
        %954 = vmatpush1.bf16.xpose.msra.mxu0 0
        %955 = vmatprep.subr.bf16.mxu0 0
        %956 = vmatpush1.bf16.xpose.msra.mxu0 0
        %957 = vmatprep.subr.bf16.mxu0 0
        %958 = vmatpush1.bf16.xpose.msra.mxu0 %v941
        %959 = vmatprep.subr.bf16.mxu0 0
        %960 = vmatpush2.bf16.xpose.msra.mxu0 0
        %961 = vmatprep.subr.bf16.mxu0 0
        %962 = vmatpush2.bf16.xpose.msra.mxu0 0
        %963 = vmatprep.subr.bf16.mxu0 0
        %964 = vmatpush2.bf16.xpose.msra.mxu0 0
        %965 = vmatprep.subr.bf16.mxu0 0
        %966 = vmatpush2.bf16.xpose.msra.mxu0 0
        %967 = vmatprep.subr.bf16.mxu0 0
        %968 = vmatpush2.bf16.xpose.msra.mxu0 0
        %969 = vmatprep.subr.bf16.mxu0 0
        %970 = vmatpush2.bf16.xpose.msra.mxu0 0
        %971 = vmatprep.subr.bf16.mxu0 0
        %972 = vmatpush2.bf16.xpose.msra.mxu0 0
        %973 = vmatprep.subr.bf16.mxu0 0
        %974 = vmatpush2.bf16.xpose.msra.mxu0 0
        %975 = vmatprep.mubr.bf16.mxu0 0
        %976 = vmatmul.mubr.bf16.gmra.mxu0 %v938
        %v977 = vpop.f32.mrf.mxu0
        %v978 = vadd.f32 0.0, %v977
        %v979 = vpop.f32.mrf.mxu0
        %v980 = vpop.f32.mrf.mxu0
        %v981 = vpop.f32.mrf.mxu0
        %982 = vdwg.mxu0
        %v983 = vsel %vm821, %v978, -inf
        %984 = vmax.xlane.f32.xlu0 %v983
        %v985 = vpop.xlane.xlu0 %984
        %v986 = vsub.f32 %v978, %v985
        %v987 = vmul.f32 %v986, 1.442695
        %v988 = vpow.pop %v987
        %v989 = vsel %vm821, %v988, 0.0
        %990 = vadd.xlane.f32.xlu0 %v989
        %v991 = vpop.xlane.xlu0 %990
        %v992 = vrcp.pop %v991
        %v993 = vmul.f32 %v988, %v992
        %v994 = vpack.c.bf16 %v993, %v993
        %s995 = scalar_lea.vmem %s610, 4 [#allocation18]
        %996 = vst.msk [vmem:[%s995] sm:$0xf] %vm880, %v994
        %998 = vrot.lane.b32.xlu0 %v820, 120
        %v999 = vpop.permute.xlu0 %998
        %v1001 = vsel %vm821, %v994, 0
        %v1004 = vsel %vm885, %v999, 0
        %1006 = vmatprep.subr.bf16.mxu0 0
        %1007 = vmatpush1.bf16.msra.mxu0 0
        %1008 = vmatprep.subr.bf16.mxu0 0
        %1009 = vmatpush1.bf16.msra.mxu0 0
        %1010 = vmatprep.subr.bf16.mxu0 0
        %1011 = vmatpush1.bf16.msra.mxu0 0
        %1012 = vmatprep.subr.bf16.mxu0 0
        %1013 = vmatpush1.bf16.msra.mxu0 0
        %1014 = vmatprep.subr.bf16.mxu0 0
        %1015 = vmatpush1.bf16.msra.mxu0 0
        %1016 = vmatprep.subr.bf16.mxu0 0
        %1017 = vmatpush1.bf16.msra.mxu0 0
        %1018 = vmatprep.subr.bf16.mxu0 0
        %1019 = vmatpush1.bf16.msra.mxu0 0
        %1020 = vmatprep.subr.bf16.mxu0 0
        %1021 = vmatpush1.bf16.msra.mxu0 %v1004
        %1022 = vmatprep.subr.bf16.mxu0 0
        %1023 = vmatpush2.bf16.msra.mxu0 0
        %1024 = vmatprep.subr.bf16.mxu0 0
        %1025 = vmatpush2.bf16.msra.mxu0 0
        %1026 = vmatprep.subr.bf16.mxu0 0
        %1027 = vmatpush2.bf16.msra.mxu0 0
        %1028 = vmatprep.subr.bf16.mxu0 0
        %1029 = vmatpush2.bf16.msra.mxu0 0
        %1030 = vmatprep.subr.bf16.mxu0 0
        %1031 = vmatpush2.bf16.msra.mxu0 0
        %1032 = vmatprep.subr.bf16.mxu0 0
        %1033 = vmatpush2.bf16.msra.mxu0 0
        %1034 = vmatprep.subr.bf16.mxu0 0
        %1035 = vmatpush2.bf16.msra.mxu0 0
        %1036 = vmatprep.subr.bf16.mxu0 0
        %1037 = vmatpush2.bf16.msra.mxu0 0
        %1038 = vmatprep.mubr.bf16.mxu0 0
        %1039 = vmatmul.mubr.bf16.gmra.mxu0 %v1001
        %v1040 = vpop.f32.mrf.mxu0
        %v1041 = vadd.f32 0.0, %v1040
        %v1042 = vpop.f32.mrf.mxu0
        %v1043 = vpop.f32.mrf.mxu0
        %v1044 = vpop.f32.mrf.mxu0
        %1045 = vdwg.mxu0
        %v1046 = vpack.c.bf16 %v1041, %v1041
        %v1047 = vld [vmem:[%s9 + $0x4] sm:$0xf]
        %v1049 = vsel %vm821, %v1046, 0
        %v1052 = vsel %vm885, %v1047, 0
        %1054 = vmatprep.subr.bf16.mxu0 0
        %1055 = vmatpush1.bf16.msra.mxu0 0
        %1056 = vmatprep.subr.bf16.mxu0 0
        %1057 = vmatpush1.bf16.msra.mxu0 0
        %1058 = vmatprep.subr.bf16.mxu0 0
        %1059 = vmatpush1.bf16.msra.mxu0 0
        %1060 = vmatprep.subr.bf16.mxu0 0
        %1061 = vmatpush1.bf16.msra.mxu0 0
        %1062 = vmatprep.subr.bf16.mxu0 0
        %1063 = vmatpush1.bf16.msra.mxu0 0
        %1064 = vmatprep.subr.bf16.mxu0 0
        %1065 = vmatpush1.bf16.msra.mxu0 0
        %1066 = vmatprep.subr.bf16.mxu0 0
        %1067 = vmatpush1.bf16.msra.mxu0 0
        %1068 = vmatprep.subr.bf16.mxu0 0
        %1069 = vmatpush1.bf16.msra.mxu0 %v1052
        %1070 = vmatprep.subr.bf16.mxu0 0
        %1071 = vmatpush2.bf16.msra.mxu0 0
        %1072 = vmatprep.subr.bf16.mxu0 0
        %1073 = vmatpush2.bf16.msra.mxu0 0
        %1074 = vmatprep.subr.bf16.mxu0 0
        %1075 = vmatpush2.bf16.msra.mxu0 0
        %1076 = vmatprep.subr.bf16.mxu0 0
        %1077 = vmatpush2.bf16.msra.mxu0 0
        %1078 = vmatprep.subr.bf16.mxu0 0
        %1079 = vmatpush2.bf16.msra.mxu0 0
        %1080 = vmatprep.subr.bf16.mxu0 0
        %1081 = vmatpush2.bf16.msra.mxu0 0
        %1082 = vmatprep.subr.bf16.mxu0 0
        %1083 = vmatpush2.bf16.msra.mxu0 0
        %1084 = vmatprep.subr.bf16.mxu0 0
        %1085 = vmatpush2.bf16.msra.mxu0 0
        %1086 = vmatprep.mubr.bf16.mxu0 0
        %1087 = vmatmul.mubr.bf16.gmra.mxu0 %v1049
        %v1088 = vpop.f32.mrf.mxu0
        %v1089 = vadd.f32 0.0, %v1088
        %v1090 = vpop.f32.mrf.mxu0
        %v1091 = vpop.f32.mrf.mxu0
        %v1092 = vpop.f32.mrf.mxu0
        %1093 = vdwg.mxu0
        %v1095 = vsel %vm821, %v929, 0
        %v1098 = vsel %vm885, %v930, 0
        %1100 = vmatprep.subr.bf16.mxu0 0
        %1101 = vmatpush1.bf16.msra.mxu0 0
        %1102 = vmatprep.subr.bf16.mxu0 0
        %1103 = vmatpush1.bf16.msra.mxu0 0
        %1104 = vmatprep.subr.bf16.mxu0 0
        %1105 = vmatpush1.bf16.msra.mxu0 0
        %1106 = vmatprep.subr.bf16.mxu0 0
        %1107 = vmatpush1.bf16.msra.mxu0 0
        %1108 = vmatprep.subr.bf16.mxu0 0
        %1109 = vmatpush1.bf16.msra.mxu0 0
        %1110 = vmatprep.subr.bf16.mxu0 0
        %1111 = vmatpush1.bf16.msra.mxu0 0
        %1112 = vmatprep.subr.bf16.mxu0 0
        %1113 = vmatpush1.bf16.msra.mxu0 0
        %1114 = vmatprep.subr.bf16.mxu0 0
        %1115 = vmatpush1.bf16.msra.mxu0 %v1098
        %1116 = vmatprep.subr.bf16.mxu0 0
        %1117 = vmatpush2.bf16.msra.mxu0 0
        %1118 = vmatprep.subr.bf16.mxu0 0
        %1119 = vmatpush2.bf16.msra.mxu0 0
        %1120 = vmatprep.subr.bf16.mxu0 0
        %1121 = vmatpush2.bf16.msra.mxu0 0
        %1122 = vmatprep.subr.bf16.mxu0 0
        %1123 = vmatpush2.bf16.msra.mxu0 0
        %1124 = vmatprep.subr.bf16.mxu0 0
        %1125 = vmatpush2.bf16.msra.mxu0 0
        %1126 = vmatprep.subr.bf16.mxu0 0
        %1127 = vmatpush2.bf16.msra.mxu0 0
        %1128 = vmatprep.subr.bf16.mxu0 0
        %1129 = vmatpush2.bf16.msra.mxu0 0
        %1130 = vmatprep.subr.bf16.mxu0 0
        %1131 = vmatpush2.bf16.msra.mxu0 0
        %1132 = vmatprep.mubr.bf16.mxu0 0
        %1133 = vmatmul.mubr.bf16.gmra.mxu0 %v1095
        %v1134 = vpop.f32.mrf.mxu0
        %v1135 = vadd.f32 %v1089, %v1134
        %v1136 = vpop.f32.mrf.mxu0
        %v1137 = vpop.f32.mrf.mxu0
        %v1138 = vpop.f32.mrf.mxu0
        %1139 = vdwg.mxu0
        %1140 = vrot.lane.b32.xlu0 %v818, 112
        %v1141 = vpop.permute.xlu0 %1140
        %1142 = vrot.lane.b32.xlu0 %v819, 112
        %v1143 = vpop.permute.xlu0 %1142
        %v1145 = vsel %vm821, %v1141, 0
        %v1148 = vsel %vm821, %v1143, 0
        %1150 = vmatprep.subr.bf16.mxu0 0
        %1151 = vmatpush1.bf16.xpose.msra.mxu0 0
        %1152 = vmatprep.subr.bf16.mxu0 0
        %1153 = vmatpush1.bf16.xpose.msra.mxu0 0
        %1154 = vmatprep.subr.bf16.mxu0 0
        %1155 = vmatpush1.bf16.xpose.msra.mxu0 0
        %1156 = vmatprep.subr.bf16.mxu0 0
        %1157 = vmatpush1.bf16.xpose.msra.mxu0 0
        %1158 = vmatprep.subr.bf16.mxu0 0
        %1159 = vmatpush1.bf16.xpose.msra.mxu0 0
        %1160 = vmatprep.subr.bf16.mxu0 0
        %1161 = vmatpush1.bf16.xpose.msra.mxu0 0
        %1162 = vmatprep.subr.bf16.mxu0 0
        %1163 = vmatpush1.bf16.xpose.msra.mxu0 0
        %1164 = vmatprep.subr.bf16.mxu0 0
        %1165 = vmatpush1.bf16.xpose.msra.mxu0 %v1148
        %1166 = vmatprep.subr.bf16.mxu0 0
        %1167 = vmatpush2.bf16.xpose.msra.mxu0 0
        %1168 = vmatprep.subr.bf16.mxu0 0
        %1169 = vmatpush2.bf16.xpose.msra.mxu0 0
        %1170 = vmatprep.subr.bf16.mxu0 0
        %1171 = vmatpush2.bf16.xpose.msra.mxu0 0
        %1172 = vmatprep.subr.bf16.mxu0 0
        %1173 = vmatpush2.bf16.xpose.msra.mxu0 0
        %1174 = vmatprep.subr.bf16.mxu0 0
        %1175 = vmatpush2.bf16.xpose.msra.mxu0 0
        %1176 = vmatprep.subr.bf16.mxu0 0
        %1177 = vmatpush2.bf16.xpose.msra.mxu0 0
        %1178 = vmatprep.subr.bf16.mxu0 0
        %1179 = vmatpush2.bf16.xpose.msra.mxu0 0
        %1180 = vmatprep.subr.bf16.mxu0 0
        %1181 = vmatpush2.bf16.xpose.msra.mxu0 0
        %1182 = vmatprep.mubr.bf16.mxu0 0
        %1183 = vmatmul.mubr.bf16.gmra.mxu0 %v1145
        %v1184 = vpop.f32.mrf.mxu0
        %v1185 = vadd.f32 0.0, %v1184
        %v1186 = vpop.f32.mrf.mxu0
        %v1187 = vpop.f32.mrf.mxu0
        %v1188 = vpop.f32.mrf.mxu0
        %1189 = vdwg.mxu0
        %v1190 = vsel %vm821, %v1185, -inf
        %1191 = vmax.xlane.f32.xlu0 %v1190
        %v1192 = vpop.xlane.xlu0 %1191
        %v1193 = vsub.f32 %v1185, %v1192
        %v1194 = vmul.f32 %v1193, 1.442695
        %v1195 = vpow.pop %v1194
        %v1196 = vsel %vm821, %v1195, 0.0
        %1197 = vadd.xlane.f32.xlu0 %v1196
        %v1198 = vpop.xlane.xlu0 %1197
        %v1199 = vrcp.pop %v1198
        %v1200 = vmul.f32 %v1195, %v1199
        %v1201 = vpack.c.bf16 %v1200, %v1200
        %s1202 = scalar_lea.vmem %s610, 8 [#allocation18]
        %1203 = vst.msk [vmem:[%s1202] sm:$0xf] %vm880, %v1201
        %1204 = vrot.lane.b32.xlu0 %v820, 112
        %v1205 = vpop.permute.xlu0 %1204
        %v1207 = vsel %vm821, %v1201, 0
        %v1210 = vsel %vm885, %v1205, 0
        %1212 = vmatprep.subr.bf16.mxu0 0
        %1213 = vmatpush1.bf16.msra.mxu0 0
        %1214 = vmatprep.subr.bf16.mxu0 0
        %1215 = vmatpush1.bf16.msra.mxu0 0
        %1216 = vmatprep.subr.bf16.mxu0 0
        %1217 = vmatpush1.bf16.msra.mxu0 0
        %1218 = vmatprep.subr.bf16.mxu0 0
        %1219 = vmatpush1.bf16.msra.mxu0 0
        %1220 = vmatprep.subr.bf16.mxu0 0
        %1221 = vmatpush1.bf16.msra.mxu0 0
        %1222 = vmatprep.subr.bf16.mxu0 0
        %1223 = vmatpush1.bf16.msra.mxu0 0
        %1224 = vmatprep.subr.bf16.mxu0 0
        %1225 = vmatpush1.bf16.msra.mxu0 0
        %1226 = vmatprep.subr.bf16.mxu0 0
        %1227 = vmatpush1.bf16.msra.mxu0 %v1210
        %1228 = vmatprep.subr.bf16.mxu0 0
        %1229 = vmatpush2.bf16.msra.mxu0 0
        %1230 = vmatprep.subr.bf16.mxu0 0
        %1231 = vmatpush2.bf16.msra.mxu0 0
        %1232 = vmatprep.subr.bf16.mxu0 0
        %1233 = vmatpush2.bf16.msra.mxu0 0
        %1234 = vmatprep.subr.bf16.mxu0 0
        %1235 = vmatpush2.bf16.msra.mxu0 0
        %1236 = vmatprep.subr.bf16.mxu0 0
        %1237 = vmatpush2.bf16.msra.mxu0 0
        %1238 = vmatprep.subr.bf16.mxu0 0
        %1239 = vmatpush2.bf16.msra.mxu0 0
        %1240 = vmatprep.subr.bf16.mxu0 0
        %1241 = vmatpush2.bf16.msra.mxu0 0
        %1242 = vmatprep.subr.bf16.mxu0 0
        %1243 = vmatpush2.bf16.msra.mxu0 0
        %1244 = vmatprep.mubr.bf16.mxu0 0
        %1245 = vmatmul.mubr.bf16.gmra.mxu0 %v1207
        %v1246 = vpop.f32.mrf.mxu0
        %v1247 = vadd.f32 0.0, %v1246
        %v1248 = vpop.f32.mrf.mxu0
        %v1249 = vpop.f32.mrf.mxu0
        %v1250 = vpop.f32.mrf.mxu0
        %1251 = vdwg.mxu0
        %v1252 = vpack.c.bf16 %v1247, %v1247
        %v1253 = vld [vmem:[%s9 + $0x8] sm:$0xf]
        %v1255 = vsel %vm821, %v1252, 0
        %v1258 = vsel %vm885, %v1253, 0
        %1260 = vmatprep.subr.bf16.mxu0 0
        %1261 = vmatpush1.bf16.msra.mxu0 0
        %1262 = vmatprep.subr.bf16.mxu0 0
        %1263 = vmatpush1.bf16.msra.mxu0 0
        %1264 = vmatprep.subr.bf16.mxu0 0
        %1265 = vmatpush1.bf16.msra.mxu0 0
        %1266 = vmatprep.subr.bf16.mxu0 0
        %1267 = vmatpush1.bf16.msra.mxu0 0
        %1268 = vmatprep.subr.bf16.mxu0 0
        %1269 = vmatpush1.bf16.msra.mxu0 0
        %1270 = vmatprep.subr.bf16.mxu0 0
        %1271 = vmatpush1.bf16.msra.mxu0 0
        %1272 = vmatprep.subr.bf16.mxu0 0
        %1273 = vmatpush1.bf16.msra.mxu0 0
        %1274 = vmatprep.subr.bf16.mxu0 0
        %1275 = vmatpush1.bf16.msra.mxu0 %v1258
        %1276 = vmatprep.subr.bf16.mxu0 0
        %1277 = vmatpush2.bf16.msra.mxu0 0
        %1278 = vmatprep.subr.bf16.mxu0 0
        %1279 = vmatpush2.bf16.msra.mxu0 0
        %1280 = vmatprep.subr.bf16.mxu0 0
        %1281 = vmatpush2.bf16.msra.mxu0 0
        %1282 = vmatprep.subr.bf16.mxu0 0
        %1283 = vmatpush2.bf16.msra.mxu0 0
        %1284 = vmatprep.subr.bf16.mxu0 0
        %1285 = vmatpush2.bf16.msra.mxu0 0
        %1286 = vmatprep.subr.bf16.mxu0 0
        %1287 = vmatpush2.bf16.msra.mxu0 0
        %1288 = vmatprep.subr.bf16.mxu0 0
        %1289 = vmatpush2.bf16.msra.mxu0 0
        %1290 = vmatprep.subr.bf16.mxu0 0
        %1291 = vmatpush2.bf16.msra.mxu0 0
        %1292 = vmatprep.mubr.bf16.mxu0 0
        %1293 = vmatmul.mubr.bf16.gmra.mxu0 %v1255
        %v1294 = vpop.f32.mrf.mxu0
        %v1295 = vadd.f32 0.0, %v1294
        %v1296 = vpop.f32.mrf.mxu0
        %v1297 = vpop.f32.mrf.mxu0
        %v1298 = vpop.f32.mrf.mxu0
        %1299 = vdwg.mxu0
        %v1300 = vadd.f32 %v1135, %v1295
        %1301 = vrot.lane.b32.xlu0 %v818, 104
        %v1302 = vpop.permute.xlu0 %1301
        %1303 = vrot.lane.b32.xlu0 %v819, 104
        %v1304 = vpop.permute.xlu0 %1303
        %v1306 = vsel %vm821, %v1302, 0
        %v1309 = vsel %vm821, %v1304, 0
        %1311 = vmatprep.subr.bf16.mxu0 0
        %1312 = vmatpush1.bf16.xpose.msra.mxu0 0
        %1313 = vmatprep.subr.bf16.mxu0 0
        %1314 = vmatpush1.bf16.xpose.msra.mxu0 0
        %1315 = vmatprep.subr.bf16.mxu0 0
        %1316 = vmatpush1.bf16.xpose.msra.mxu0 0
        %1317 = vmatprep.subr.bf16.mxu0 0
        %1318 = vmatpush1.bf16.xpose.msra.mxu0 0
        %1319 = vmatprep.subr.bf16.mxu0 0
        %1320 = vmatpush1.bf16.xpose.msra.mxu0 0
        %1321 = vmatprep.subr.bf16.mxu0 0
        %1322 = vmatpush1.bf16.xpose.msra.mxu0 0
        %1323 = vmatprep.subr.bf16.mxu0 0
        %1324 = vmatpush1.bf16.xpose.msra.mxu0 0
        %1325 = vmatprep.subr.bf16.mxu0 0
        %1326 = vmatpush1.bf16.xpose.msra.mxu0 %v1309
        %1327 = vmatprep.subr.bf16.mxu0 0
        %1328 = vmatpush2.bf16.xpose.msra.mxu0 0
        %1329 = vmatprep.subr.bf16.mxu0 0
        %1330 = vmatpush2.bf16.xpose.msra.mxu0 0
        %1331 = vmatprep.subr.bf16.mxu0 0
        %1332 = vmatpush2.bf16.xpose.msra.mxu0 0
        %1333 = vmatprep.subr.bf16.mxu0 0
        %1334 = vmatpush2.bf16.xpose.msra.mxu0 0
        %1335 = vmatprep.subr.bf16.mxu0 0
        %1336 = vmatpush2.bf16.xpose.msra.mxu0 0
        %1337 = vmatprep.subr.bf16.mxu0 0
        %1338 = vmatpush2.bf16.xpose.msra.mxu0 0
        %1339 = vmatprep.subr.bf16.mxu0 0
        %1340 = vmatpush2.bf16.xpose.msra.mxu0 0
        %1341 = vmatprep.subr.bf16.mxu0 0
        %1342 = vmatpush2.bf16.xpose.msra.mxu0 0
        %1343 = vmatprep.mubr.bf16.mxu0 0
        %1344 = vmatmul.mubr.bf16.gmra.mxu0 %v1306
        %v1345 = vpop.f32.mrf.mxu0
        %v1346 = vadd.f32 0.0, %v1345
        %v1347 = vpop.f32.mrf.mxu0
        %v1348 = vpop.f32.mrf.mxu0
        %v1349 = vpop.f32.mrf.mxu0
        %1350 = vdwg.mxu0
        %v1351 = vsel %vm821, %v1346, -inf
        %1352 = vmax.xlane.f32.xlu0 %v1351
        %v1353 = vpop.xlane.xlu0 %1352
        %v1354 = vsub.f32 %v1346, %v1353
        %v1355 = vmul.f32 %v1354, 1.442695
        %v1356 = vpow.pop %v1355
        %v1357 = vsel %vm821, %v1356, 0.0
        %1358 = vadd.xlane.f32.xlu0 %v1357
        %v1359 = vpop.xlane.xlu0 %1358
        %v1360 = vrcp.pop %v1359
        %v1361 = vmul.f32 %v1356, %v1360
        %v1362 = vpack.c.bf16 %v1361, %v1361
        %s1363 = scalar_lea.vmem %s610, 12 [#allocation18]
        %1364 = vst.msk [vmem:[%s1363] sm:$0xf] %vm880, %v1362
        %1365 = vrot.lane.b32.xlu0 %v820, 104
        %v1366 = vpop.permute.xlu0 %1365
        %v1368 = vsel %vm821, %v1362, 0
        %v1371 = vsel %vm885, %v1366, 0
        %1373 = vmatprep.subr.bf16.mxu0 0
        %1374 = vmatpush1.bf16.msra.mxu0 0
        %1375 = vmatprep.subr.bf16.mxu0 0
        %1376 = vmatpush1.bf16.msra.mxu0 0
        %1377 = vmatprep.subr.bf16.mxu0 0
        %1378 = vmatpush1.bf16.msra.mxu0 0
        %1379 = vmatprep.subr.bf16.mxu0 0
        %1380 = vmatpush1.bf16.msra.mxu0 0
        %1381 = vmatprep.subr.bf16.mxu0 0
        %1382 = vmatpush1.bf16.msra.mxu0 0
        %1383 = vmatprep.subr.bf16.mxu0 0
        %1384 = vmatpush1.bf16.msra.mxu0 0
        %1385 = vmatprep.subr.bf16.mxu0 0
        %1386 = vmatpush1.bf16.msra.mxu0 0
        %1387 = vmatprep.subr.bf16.mxu0 0
        %1388 = vmatpush1.bf16.msra.mxu0 %v1371
        %1389 = vmatprep.subr.bf16.mxu0 0
        %1390 = vmatpush2.bf16.msra.mxu0 0
        %1391 = vmatprep.subr.bf16.mxu0 0
        %1392 = vmatpush2.bf16.msra.mxu0 0
        %1393 = vmatprep.subr.bf16.mxu0 0
        %1394 = vmatpush2.bf16.msra.mxu0 0
        %1395 = vmatprep.subr.bf16.mxu0 0
        %1396 = vmatpush2.bf16.msra.mxu0 0
        %1397 = vmatprep.subr.bf16.mxu0 0
        %1398 = vmatpush2.bf16.msra.mxu0 0
        %1399 = vmatprep.subr.bf16.mxu0 0
        %1400 = vmatpush2.bf16.msra.mxu0 0
        %1401 = vmatprep.subr.bf16.mxu0 0
        %1402 = vmatpush2.bf16.msra.mxu0 0
        %1403 = vmatprep.subr.bf16.mxu0 0
        %1404 = vmatpush2.bf16.msra.mxu0 0
        %1405 = vmatprep.mubr.bf16.mxu0 0
        %1406 = vmatmul.mubr.bf16.gmra.mxu0 %v1368
        %v1407 = vpop.f32.mrf.mxu0
        %v1408 = vadd.f32 0.0, %v1407
        %v1409 = vpop.f32.mrf.mxu0
        %v1410 = vpop.f32.mrf.mxu0
        %v1411 = vpop.f32.mrf.mxu0
        %1412 = vdwg.mxu0
        %v1413 = vpack.c.bf16 %v1408, %v1408
        %v1414 = vld [vmem:[%s9 + $0xc] sm:$0xf]
        %v1416 = vsel %vm821, %v1413, 0
        %v1419 = vsel %vm885, %v1414, 0
        %1421 = vmatprep.subr.bf16.mxu0 0
        %1422 = vmatpush1.bf16.msra.mxu0 0
        %1423 = vmatprep.subr.bf16.mxu0 0
        %1424 = vmatpush1.bf16.msra.mxu0 0
        %1425 = vmatprep.subr.bf16.mxu0 0
        %1426 = vmatpush1.bf16.msra.mxu0 0
        %1427 = vmatprep.subr.bf16.mxu0 0
        %1428 = vmatpush1.bf16.msra.mxu0 0
        %1429 = vmatprep.subr.bf16.mxu0 0
        %1430 = vmatpush1.bf16.msra.mxu0 0
        %1431 = vmatprep.subr.bf16.mxu0 0
        %1432 = vmatpush1.bf16.msra.mxu0 0
        %1433 = vmatprep.subr.bf16.mxu0 0
        %1434 = vmatpush1.bf16.msra.mxu0 0
        %1435 = vmatprep.subr.bf16.mxu0 0
        %1436 = vmatpush1.bf16.msra.mxu0 %v1419
        %1437 = vmatprep.subr.bf16.mxu0 0
        %1438 = vmatpush2.bf16.msra.mxu0 0
        %1439 = vmatprep.subr.bf16.mxu0 0
        %1440 = vmatpush2.bf16.msra.mxu0 0
        %1441 = vmatprep.subr.bf16.mxu0 0
        %1442 = vmatpush2.bf16.msra.mxu0 0
        %1443 = vmatprep.subr.bf16.mxu0 0
        %1444 = vmatpush2.bf16.msra.mxu0 0
        %1445 = vmatprep.subr.bf16.mxu0 0
        %1446 = vmatpush2.bf16.msra.mxu0 0
        %1447 = vmatprep.subr.bf16.mxu0 0
        %1448 = vmatpush2.bf16.msra.mxu0 0
        %1449 = vmatprep.subr.bf16.mxu0 0
        %1450 = vmatpush2.bf16.msra.mxu0 0
        %1451 = vmatprep.subr.bf16.mxu0 0
        %1452 = vmatpush2.bf16.msra.mxu0 0
        %1453 = vmatprep.mubr.bf16.mxu0 0
        %1454 = vmatmul.mubr.bf16.gmra.mxu0 %v1416
        %v1455 = vpop.f32.mrf.mxu0
        %v1456 = vadd.f32 0.0, %v1455
        %v1457 = vpop.f32.mrf.mxu0
        %v1458 = vpop.f32.mrf.mxu0
        %v1459 = vpop.f32.mrf.mxu0
        %1460 = vdwg.mxu0
        %v1461 = vadd.f32 %v1300, %v1456
        %v1462 = vld [vmem:[%s10] sm:$0x1]
        %v1464 = vlaneseq
        %v1465 = vshrl.u32 %v1464, 7
        %v1466 = vsub.s32 0, %v1465
        %v1467 = vrot.slane %v1462, %v1466
        %v1469 = vadd.f32 %v1461, %v1467
        %1470 = vst.msk [vmem:[%s603] sm:$0xff] %vm641, %v1469
        %s1471 = sand.u32 %s309, 1
        %s1472 = scalar_lea.sflag [#allocation4], %s1471
        %s1473 = sand.u32 %s309, 1
        %s1474 = smul.addr %s1473, 8
        %s1475 = scalar_lea.vmem [#allocation17], %s1474
        %s1476 = sand.u32 %s337, 1
        %s1477 = scalar_lea.sflag [#allocation19], %s1476
        %s1478 = sand.u32 %s337, 1
        %s1479 = smul.addr %s1478, 16
        %s1480 = scalar_lea.vmem [#allocation18], %s1479
        // Predicated region
        $region101: #{tpu_custom_call.1} parent=63 // pred_check
          %p1481 = pneg %p319
        $region102: #{tpu_custom_call.1} parent=63 // pred_check_branch
          %1483 = sbr.rel (%p1481) target = $region104
        $region103: #{tpu_custom_call.1} parent=63 // pred_region
          %s1485 = ssub.s32 128, 128
          %1486 = vsyncadd %s1472, %s1485
          %s1487 = sadd.s32 %s44, %s43
          %s1488 = smul.addr %s1487, 128
          %s1489 = scalar_lea.hbm %s11, %s1488
          %s1491 = sshll.u32 %s1475, 4
          %s1492 = int_to_ptr.vmem [resolvable:$true] %s1491
          %1494 = dma.vmem_to_hbm [thread:$0]  %s1492, 128, %s1489, %s1472
        $region104: #{tpu_custom_call.1} parent=63 // pred_fallthru
          _
        // Predicated region
        $region105: #{tpu_custom_call.1} parent=63 // pred_check
          %p1495 = pneg %p347
        $region106: #{tpu_custom_call.1} parent=63 // pred_check_branch
          %1497 = sbr.rel (%p1495) target = $region108
        $region107: #{tpu_custom_call.1} parent=63 // pred_region
          %s1499 = ssub.s32 256, 256
          %1500 = vsyncadd %s1477, %s1499
          %s1501 = smul.addr %s43, 4
          %s1502 = sadd.s32 %s44, %s1501
          %s1503 = smul.addr %s1502, 64
          %s1504 = scalar_lea.hbm %s12, %s1503
          %s1505 = sshll.u32 %s1480, 4
          %s1506 = int_to_ptr.vmem [resolvable:$true] %s1505
          %1511 = dma.vmem_to_hbm [thread:$0]  %s1506, 256, %s1504, %s1477, 64, 64, 4
        $region108: #{tpu_custom_call.1} parent=63 // pred_fallthru
          _
      $region64: #{tpu_custom_call.1} parent=5 // pred_fallthru
        _
      %p1512 = scmp.le.s32.totalorder 2, %s34
      // Predicated region
      $region109: #{tpu_custom_call.1} parent=5 // pred_check
        %p1513 = pneg %p1512
      $region110: #{tpu_custom_call.1} parent=5 // pred_check_branch
        %1515 = sbr.rel (%p1513) target = $region112
      $region111: #{tpu_custom_call.1} parent=5 // pred_region
        %s1516 = ssub.s32 %s34, 2
        // Predicated region
        $region113: #{tpu_custom_call.1} parent=111 // pred_check
          %p1517 = pneg %p325
        $region114: #{tpu_custom_call.1} parent=111 // pred_check_branch
          %1519 = sbr.rel (%p1517) target = $region116
        $region115: #{tpu_custom_call.1} parent=111 // pred_region
          %s1520 = sand.u32 %s310, 1
          %s1521 = scalar_lea.sflag [#allocation4], %s1520
          %s1522 = sand.u32 %s310, 1
          %s1523 = smul.addr %s1522, 8
          %s1524 = scalar_lea.vmem [#allocation17], %s1523
          %1525 = dma.done %s1521, 128
        $region116: #{tpu_custom_call.1} parent=111 // pred_fallthru
          _
        // Predicated region
        $region117: #{tpu_custom_call.1} parent=111 // pred_check
          %p1526 = pneg %p353
        $region118: #{tpu_custom_call.1} parent=111 // pred_check_branch
          %1528 = sbr.rel (%p1526) target = $region120
        $region119: #{tpu_custom_call.1} parent=111 // pred_region
          %s1529 = sand.u32 %s338, 1
          %s1530 = scalar_lea.sflag [#allocation19], %s1529
          %s1531 = sand.u32 %s338, 1
          %s1532 = smul.addr %s1531, 16
          %s1533 = scalar_lea.vmem [#allocation18], %s1532
          %1534 = dma.done %s1530, 256
        $region120: #{tpu_custom_call.1} parent=111 // pred_fallthru
          _
      $region112: #{tpu_custom_call.1} parent=5 // pred_fallthru
        _
    $region6: #{tpu_custom_call.1} parent=1 // loop_footer
      %s38 = sadd.s32 1, %s34
    $region7: #{tpu_custom_call.1} parent=1 // loop_footer_branch
      %33 = sbr.rel target = $region3
    $region8: #{tpu_custom_call.1} parent=1 // loop_exit
      _
    %1535 = vsyncpa [#allocation3], 1
    %s1536 = scalar_lea.sflag [#allocation3], 1
    %1537 = vsyncpa %s1536, 1
    %1538 = vsyncpa [#allocation6], 1
    %s1539 = scalar_lea.sflag [#allocation6], 1
    %1540 = vsyncpa %s1539, 1
    %1541 = vsyncpa [#allocation9], 1
    %1542 = vsyncpa [#allocation12], 1
    %1543 = vsyncpa [#allocation15], 1
    %1544 = vsyncpa [#allocation4], 1
    %s1545 = scalar_lea.sflag [#allocation4], 1
    %1546 = vsyncpa %s1545, 1
    %1547 = vsyncpa [#allocation19], 1
    %s1548 = scalar_lea.sflag [#allocation19], 1
    %1549 = vsyncpa %s1548, 1

</llo_original>
